<compile_context>
chip_gen: v6e
topology: v6e:2x2x1
jax: 0.10.0
libtpu: 0.0.40
codegen_flags: <defaults>
</compile_context>

<pallas_src>
import functools

import jax
import jax.numpy as jnp
import numpy as np
from jax.experimental import pallas as pl
from jax.experimental.pallas import tpu as pltpu

N_ELEC = 62             # electrode axis == conv kernel height (fully consumed)
K_W = 40                # temporal taps of the conv
N_OUT = 100             # conv output channels
P_OUT = 10              # AdaptiveAvgPool2d target width
C_IN_PAD = 64           # 62 -> 64   lane padding per tap
C_OUT_PAD = 128         # 100 -> 128 lane-dense accumulator / unmasked stores
TAP_GROUP = 8           # taps interleaved per MXU dot (K = 8*64 = 512, 8-aligned starts)
N_GROUPS = K_W // TAP_GROUP          # 5
K_GROUP = TAP_GROUP * C_IN_PAD       # 512


def basenet_kernel(x_ref, w_ref, b_ref, pool_ref, out_ref):
    """One batch block per grid step.

    x_ref    : (Bt, T-7, 512)  bf16  tap-interleaved input:
                                     x_ref[b, t, j*64 + c] = x[b, t+j, c]
    w_ref    : (5, 512, 128)   bf16  grouped conv weights (8 taps per group)
    b_ref    : (1, 128)        f32   conv bias (zero in padded lanes)
    pool_ref : (10, L)         f32   adaptive-average-pool averaging matrix
    out_ref  : (Bt, 10, 128)   f32   pooled activations (channels padded)
    """
    n_b = x_ref.shape[0]
    t_int = x_ref.shape[1]
    l_out = t_int - (N_GROUPS - 1) * TAP_GROUP        # == T - K_W + 1

    bias = b_ref[...]                                 # (1, 128)   (hoisted)
    pool = pool_ref[...]                              # (10, L)

    @pl.loop(0, n_b)
    def _(b):
        # Temporal conv as 5 wide-K MXU dots; window starts 8*g are static and
        # sublane-aligned, so these are plain (unshifted) vector loads.
        acc = jnp.dot(x_ref[b, pl.ds(0, l_out), :], w_ref[0],
                      preferred_element_type=jnp.float32)               # (L, 128)
        for g in range(1, N_GROUPS):
            xw = x_ref[b, pl.ds(g * TAP_GROUP, l_out), :]               # (L, 512) bf16
            acc = acc + jnp.dot(xw, w_ref[g],
                                preferred_element_type=jnp.float32)     # (L, 128)
        acc = acc + bias
        # ELU(alpha=1), elementwise in f32.
        h = jnp.where(acc > 0, acc, jnp.exp(jnp.minimum(acc, 0.0)) - 1.0)
        # AdaptiveAvgPool2d((1, 10)) over time == (10, L) @ (L, 128), exact f32.
        out_ref[b] = jnp.dot(pool, h,
                             preferred_element_type=jnp.float32).astype(out_ref.dtype)


def _adaptive_avg_pool_matrix(l_in, l_out):
    """(l_out, l_in) averaging matrix replicating PyTorch adaptive-pool bins."""
    mat = np.zeros((l_out, l_in), np.float32)
    for i in range(l_out):
        s = (i * l_in) // l_out
        e = ((i + 1) * l_in + l_out - 1) // l_out     # ceil((i+1)*L/O)
        mat[i, s:e] = 1.0 / float(e - s)
    return jnp.asarray(mat)


def init_params(key):
    # Mapping from PyTorch Conv2d(1, 100, (62, 40)):
    #   weight (100, 1, 62, 40) -> w[k, h, c] = weight[c, 0, h, k];  bias (100,) -> b
    kw, kb = jax.random.split(key)
    bound = 1.0 / np.sqrt(N_ELEC * K_W)
    w = jax.random.uniform(kw, (K_W, N_ELEC, N_OUT), jnp.float32, -bound, bound)
    b = jax.random.uniform(kb, (N_OUT,), jnp.float32, -bound, bound)
    return {"w": w, "b": b}


def _prep_weights(params):
    # Pad channels, then regroup 8 consecutive taps along the contraction axis so
    # row (j*64 + c) of group g corresponds to tap g*8+j, input channel c — the
    # same layout as the interleaved input lanes.
    w = jnp.zeros((K_W, C_IN_PAD, C_OUT_PAD), jnp.float32)
    w = w.at[:, :N_ELEC, :N_OUT].set(params["w"])
    w = w.reshape(N_GROUPS, K_GROUP, C_OUT_PAD).astype(jnp.bfloat16)
    b = jnp.zeros((1, C_OUT_PAD), jnp.float32).at[0, :N_OUT].set(params["b"])
    return w, b


@functools.partial(jax.jit, static_argnames=("block_b",))
def basenet_forward(x, params, block_b=32):
    """x: (B, 1, 62, T) NCHW  ->  (B, 1000), matching PyTorch output.view(B, -1)."""
    B, _, H, T = x.shape
    assert H == N_ELEC and T >= K_W
    l_out = T - K_W + 1
    t_int = T - TAP_GROUP + 1

    # Batch blocking: amortize per-step pipeline overhead, but keep the grid at
    # least 2 steps so the "parallel" axis can shard across v7x's 2 TensorCores.
    bt = max(1, min(block_b, B))
    if B >= 2:
        bt = min(bt, -(-B // 2))
    b_pad = -(-B // bt) * bt

    # Host-side layout prep (single fused pass under jit):
    # (B,1,62,T) -> bf16 -> (B,T,64) time-on-sublanes, channels-on-lanes ->
    # interleave 8 consecutive time steps onto lanes -> (b_pad, T-7, 512) bf16.
    xk = jnp.transpose(x[:, 0, :, :].astype(jnp.bfloat16), (0, 2, 1))   # (B, T, 62)
    xk = jnp.pad(xk, ((0, b_pad - B), (0, 0), (0, C_IN_PAD - N_ELEC)))  # (b_pad, T, 64)
    x_int = jnp.concatenate([xk[:, j:j + t_int, :] for j in range(TAP_GROUP)],
                            axis=-1)                                    # (b_pad, T-7, 512)

    w, b = _prep_weights(params)
    pool = _adaptive_avg_pool_matrix(l_out, P_OUT)

    # VMEM budget: double-buffered x/out blocks + (conservatively doubled) constants.
    x_blk = bt * t_int * K_GROUP * 2
    out_blk = bt * P_OUT * C_OUT_PAD * 4
    const = N_GROUPS * K_GROUP * C_OUT_PAD * 2 + C_OUT_PAD * 4 + P_OUT * l_out * 4
    vmem_limit = int(min(max(2 * (x_blk + out_blk) + 2 * const + (4 << 20), 16 << 20),
                         64 << 20))

    out = pl.pallas_call(
        basenet_kernel,
        out_shape=jax.ShapeDtypeStruct((b_pad, P_OUT, C_OUT_PAD), jnp.float32),
        grid_spec=pltpu.PrefetchScalarGridSpec(
            num_scalar_prefetch=0,
            grid=(b_pad // bt,),
            in_specs=[
                pl.BlockSpec((bt, t_int, K_GROUP), lambda g: (g, 0, 0)),
                pl.BlockSpec((N_GROUPS, K_GROUP, C_OUT_PAD), lambda g: (0, 0, 0)),
                pl.BlockSpec((1, C_OUT_PAD), lambda g: (0, 0)),
                pl.BlockSpec((P_OUT, l_out), lambda g: (0, 0)),
            ],
            out_specs=pl.BlockSpec((bt, P_OUT, C_OUT_PAD), lambda g: (g, 0, 0)),
        ),
        compiler_params=pltpu.CompilerParams(
            dimension_semantics=("parallel",),      # batch blocks are independent
            vmem_limit_bytes=vmem_limit),
    )(x_int, w, b, pool)

    # Channel-major flatten matching torch .view(B, -1) on (B, 100, 1, 10).
    out = out[:B, :, :N_OUT]
    return jnp.transpose(out, (0, 2, 1)).reshape(B, N_OUT * P_OUT)


def basenet_reference(x, params):
    """Pure-JAX f32 reference of the PyTorch module (conv -> ELU -> pool -> flatten)."""
    xk = jnp.transpose(x[:, 0, :, :], (0, 2, 1)).astype(jnp.float32)    # (B, T, 62)
    T = xk.shape[1]
    l_out = T - K_W + 1
    conv = sum(jnp.einsum("blh,hc->blc", xk[:, w:w + l_out, :], params["w"][w])
               for w in range(K_W)) + params["b"]
    act = jnp.where(conv > 0, conv, jnp.exp(conv) - 1.0)
    pool = _adaptive_avg_pool_matrix(l_out, P_OUT)
    pooled = jnp.einsum("pl,blc->bpc", pool, act)
    return jnp.transpose(pooled, (0, 2, 1)).reshape(x.shape[0], -1)


if __name__ == "__main__":
    key = jax.random.PRNGKey(0)
    k_x, k_p = jax.random.split(key)

    # Small demo shapes consistent with the module: NCHW (B, 1, 62, T).
    # T = 143 -> conv length L = 104 -> adaptive pool to 10 -> 100 * 10 = 1000 feats.
    B, T = 8, 143
    x = jax.random.normal(k_x, (B, 1, N_ELEC, T), dtype=jnp.float32)
    params = init_params(k_p)

    out = basenet_forward(x, params, block_b=32)   # capped to bt=4 -> grid=(2,)
    jax.block_until_ready(out)
    assert out.shape == (B, N_OUT * P_OUT), out.shape

    # Sanity check vs. pure-JAX f32 reference (bf16 matmul operands -> loose tol).
    ref = basenet_reference(x, params)
    max_err = float(jnp.max(jnp.abs(out - ref)))
    assert max_err < 0.1, f"max abs error {max_err}"

    print("KERNEL_OK")
</pallas_src>

<mosaic_0001>
module attributes {stable_mosaic.version = 11 : i64} {
  func.func @basenet_kernel(%arg0: i32, %arg1: memref<4x136x512xbf16, #tpu.memory_space<vmem>>, %arg2: memref<5x512x128xbf16, #tpu.memory_space<vmem>>, %arg3: memref<1x128xf32, #tpu.memory_space<vmem>>, %arg4: memref<10x104xf32, #tpu.memory_space<vmem>>, %arg5: memref<4x10x128xf32, #tpu.memory_space<vmem>>) attributes {dimension_semantics = [#tpu.dimension_semantics<parallel>], iteration_bounds = array<i64: 2>, scalar_prefetch = 0 : i64, scratch_operands = 0 : i64, tpu.core_type = #tpu.core_type<tc>, window_params = [{transform_indices = @transform_0, window_bounds = array<i64: 4, 136, 512>}, {pipeline_mode = #tpu.pipeline_mode<synchronous>, transform_indices = @transform_1, window_bounds = array<i64: 5, 512, 128>}, {pipeline_mode = #tpu.pipeline_mode<synchronous>, transform_indices = @transform_2, window_bounds = array<i64: 1, 128>}, {pipeline_mode = #tpu.pipeline_mode<synchronous>, transform_indices = @transform_3, window_bounds = array<i64: 10, 104>}, {transform_indices = @transform_4, window_bounds = array<i64: 4, 10, 128>}]} {
    %c0 = arith.constant 0 : index
    %c0_0 = arith.constant 0 : index
    %0 = vector.load %arg3[%c0, %c0_0] : memref<1x128xf32, #tpu.memory_space<vmem>>, vector<1x128xf32>
    %c0_1 = arith.constant 0 : index
    %c0_2 = arith.constant 0 : index
    %1 = vector.load %arg4[%c0_1, %c0_2] : memref<10x104xf32, #tpu.memory_space<vmem>>, vector<10x104xf32>
    %c0_i32 = arith.constant 0 : i32
    %c4_i32 = arith.constant 4 : i32
    %2 = arith.addi %c0_i32, %c4_i32 : i32
    %c1_i32 = arith.constant 1 : i32
    scf.for %arg6 = %c0_i32 to %2 step %c1_i32  : i32 {
      %c1_i32_4 = arith.constant 1 : i32
      %3 = arith.muli %arg6, %c1_i32_4 : i32
      %c0_i32_5 = arith.constant 0 : i32
      %4 = arith.addi %c0_i32_5, %3 : i32
      %5 = arith.index_cast %4 : i32 to index
      %c0_6 = arith.constant 0 : index
      %c0_7 = arith.constant 0 : index
      %6 = vector.load %arg1[%5, %c0_6, %c0_7] : memref<4x136x512xbf16, #tpu.memory_space<vmem>>, vector<1x104x512xbf16>
      %7 = vector.shape_cast %6 : vector<1x104x512xbf16> to vector<104x512xbf16>
      %c0_8 = arith.constant 0 : index
      %c0_9 = arith.constant 0 : index
      %c0_10 = arith.constant 0 : index
      %8 = vector.load %arg2[%c0_8, %c0_9, %c0_10] : memref<5x512x128xbf16, #tpu.memory_space<vmem>>, vector<1x512x128xbf16>
      %9 = vector.shape_cast %8 : vector<1x512x128xbf16> to vector<512x128xbf16>
      %cst = arith.constant dense<0.000000e+00> : vector<104x128xf32>
      %10 = tpu.matmul %7, %9, %cst {dimension_numbers = #tpu.dot_dimension_numbers<[1], [0], [0], [1], [0, 0, 1, 1], [], []>} : vector<104x512xbf16>, vector<512x128xbf16>, vector<104x128xf32> -> vector<104x128xf32>
      %11 = arith.index_cast %4 : i32 to index
      %c8 = arith.constant 8 : index
      %c0_11 = arith.constant 0 : index
      %12 = vector.load %arg1[%11, %c8, %c0_11] : memref<4x136x512xbf16, #tpu.memory_space<vmem>>, vector<1x104x512xbf16>
      %13 = vector.shape_cast %12 : vector<1x104x512xbf16> to vector<104x512xbf16>
      %c1 = arith.constant 1 : index
      %c0_12 = arith.constant 0 : index
      %c0_13 = arith.constant 0 : index
      %14 = vector.load %arg2[%c1, %c0_12, %c0_13] : memref<5x512x128xbf16, #tpu.memory_space<vmem>>, vector<1x512x128xbf16>
      %15 = vector.shape_cast %14 : vector<1x512x128xbf16> to vector<512x128xbf16>
      %cst_14 = arith.constant dense<0.000000e+00> : vector<104x128xf32>
      %16 = tpu.matmul %13, %15, %cst_14 {dimension_numbers = #tpu.dot_dimension_numbers<[1], [0], [0], [1], [0, 0, 1, 1], [], []>} : vector<104x512xbf16>, vector<512x128xbf16>, vector<104x128xf32> -> vector<104x128xf32>
      %17 = arith.addf %10, %16 : vector<104x128xf32>
      %18 = arith.index_cast %4 : i32 to index
      %c16 = arith.constant 16 : index
      %c0_15 = arith.constant 0 : index
      %19 = vector.load %arg1[%18, %c16, %c0_15] : memref<4x136x512xbf16, #tpu.memory_space<vmem>>, vector<1x104x512xbf16>
      %20 = vector.shape_cast %19 : vector<1x104x512xbf16> to vector<104x512xbf16>
      %c2 = arith.constant 2 : index
      %c0_16 = arith.constant 0 : index
      %c0_17 = arith.constant 0 : index
      %21 = vector.load %arg2[%c2, %c0_16, %c0_17] : memref<5x512x128xbf16, #tpu.memory_space<vmem>>, vector<1x512x128xbf16>
      %22 = vector.shape_cast %21 : vector<1x512x128xbf16> to vector<512x128xbf16>
      %cst_18 = arith.constant dense<0.000000e+00> : vector<104x128xf32>
      %23 = tpu.matmul %20, %22, %cst_18 {dimension_numbers = #tpu.dot_dimension_numbers<[1], [0], [0], [1], [0, 0, 1, 1], [], []>} : vector<104x512xbf16>, vector<512x128xbf16>, vector<104x128xf32> -> vector<104x128xf32>
      %24 = arith.addf %17, %23 : vector<104x128xf32>
      %25 = arith.index_cast %4 : i32 to index
      %c24 = arith.constant 24 : index
      %c0_19 = arith.constant 0 : index
      %26 = vector.load %arg1[%25, %c24, %c0_19] : memref<4x136x512xbf16, #tpu.memory_space<vmem>>, vector<1x104x512xbf16>
      %27 = vector.shape_cast %26 : vector<1x104x512xbf16> to vector<104x512xbf16>
      %c3 = arith.constant 3 : index
      %c0_20 = arith.constant 0 : index
      %c0_21 = arith.constant 0 : index
      %28 = vector.load %arg2[%c3, %c0_20, %c0_21] : memref<5x512x128xbf16, #tpu.memory_space<vmem>>, vector<1x512x128xbf16>
      %29 = vector.shape_cast %28 : vector<1x512x128xbf16> to vector<512x128xbf16>
      %cst_22 = arith.constant dense<0.000000e+00> : vector<104x128xf32>
      %30 = tpu.matmul %27, %29, %cst_22 {dimension_numbers = #tpu.dot_dimension_numbers<[1], [0], [0], [1], [0, 0, 1, 1], [], []>} : vector<104x512xbf16>, vector<512x128xbf16>, vector<104x128xf32> -> vector<104x128xf32>
      %31 = arith.addf %24, %30 : vector<104x128xf32>
      %32 = arith.index_cast %4 : i32 to index
      %c32 = arith.constant 32 : index
      %c0_23 = arith.constant 0 : index
      %33 = vector.load %arg1[%32, %c32, %c0_23] : memref<4x136x512xbf16, #tpu.memory_space<vmem>>, vector<1x104x512xbf16>
      %34 = vector.shape_cast %33 : vector<1x104x512xbf16> to vector<104x512xbf16>
      %c4 = arith.constant 4 : index
      %c0_24 = arith.constant 0 : index
      %c0_25 = arith.constant 0 : index
      %35 = vector.load %arg2[%c4, %c0_24, %c0_25] : memref<5x512x128xbf16, #tpu.memory_space<vmem>>, vector<1x512x128xbf16>
      %36 = vector.shape_cast %35 : vector<1x512x128xbf16> to vector<512x128xbf16>
      %cst_26 = arith.constant dense<0.000000e+00> : vector<104x128xf32>
      %37 = tpu.matmul %34, %36, %cst_26 {dimension_numbers = #tpu.dot_dimension_numbers<[1], [0], [0], [1], [0, 0, 1, 1], [], []>} : vector<104x512xbf16>, vector<512x128xbf16>, vector<104x128xf32> -> vector<104x128xf32>
      %38 = arith.addf %31, %37 : vector<104x128xf32>
      %39 = vector.broadcast %0 : vector<1x128xf32> to vector<104x128xf32>
      %40 = arith.addf %38, %39 : vector<104x128xf32>
      %cst_27 = arith.constant 0.000000e+00 : f32
      %41 = vector.broadcast %cst_27 : f32 to vector<104x128xf32>
      %42 = arith.cmpf ogt, %40, %41 : vector<104x128xf32>
      %cst_28 = arith.constant 0.000000e+00 : f32
      %43 = vector.broadcast %cst_28 : f32 to vector<104x128xf32>
      %44 = arith.minimumf %40, %43 : vector<104x128xf32>
      %45 = math.exp %44 : vector<104x128xf32>
      %cst_29 = arith.constant 1.000000e+00 : f32
      %46 = vector.broadcast %cst_29 : f32 to vector<104x128xf32>
      %47 = arith.subf %45, %46 : vector<104x128xf32>
      %48 = arith.select %42, %40, %47 : vector<104x128xi1>, vector<104x128xf32>
      %cst_30 = arith.constant dense<0.000000e+00> : vector<10x128xf32>
      %49 = tpu.matmul %1, %48, %cst_30 {dimension_numbers = #tpu.dot_dimension_numbers<[1], [0], [0], [1], [0, 0, 1, 1], [], []>} : vector<10x104xf32>, vector<104x128xf32>, vector<10x128xf32> -> vector<10x128xf32>
      %50 = arith.index_cast %4 : i32 to index
      %c0_31 = arith.constant 0 : index
      %c0_32 = arith.constant 0 : index
      %51 = vector.load %arg5[%50, %c0_31, %c0_32] : memref<4x10x128xf32, #tpu.memory_space<vmem>>, vector<1x10x128xf32>
      %52 = vector.shape_cast %51 : vector<1x10x128xf32> to vector<10x128xf32>
      %53 = vector.shape_cast %49 : vector<10x128xf32> to vector<1x10x128xf32>
      tpu.vector_store %arg5[%50, %c0_31, %c0_32], %53 {strides = array<i32>} : memref<4x10x128xf32, #tpu.memory_space<vmem>>, vector<1x10x128xf32>,
    }
    %c4_i32_3 = arith.constant 4 : i32
    return
  }
  func.func @transform_0(%arg0: i32) -> (i32, i32, i32) {
    %c0_i32 = arith.constant 0 : i32
    %c0_i32_0 = arith.constant 0 : i32
    %c0_i32_1 = arith.constant 0 : i32
    return %arg0, %c0_i32, %c0_i32_0 : i32, i32, i32
  }
  func.func @transform_1(%arg0: i32) -> (i32, i32, i32) {
    %c0_i32 = arith.constant 0 : i32
    %c0_i32_0 = arith.constant 0 : i32
    %c0_i32_1 = arith.constant 0 : i32
    %c0_i32_2 = arith.constant 0 : i32
    return %c0_i32, %c0_i32_0, %c0_i32_1 : i32, i32, i32
  }
  func.func @transform_2(%arg0: i32) -> (i32, i32) {
    %c0_i32 = arith.constant 0 : i32
    %c0_i32_0 = arith.constant 0 : i32
    %c0_i32_1 = arith.constant 0 : i32
    return %c0_i32, %c0_i32_0 : i32, i32
  }
  func.func @transform_3(%arg0: i32) -> (i32, i32) {
    %c0_i32 = arith.constant 0 : i32
    %c0_i32_0 = arith.constant 0 : i32
    %c0_i32_1 = arith.constant 0 : i32
    return %c0_i32, %c0_i32_0 : i32, i32
  }
  func.func @transform_4(%arg0: i32) -> (i32, i32, i32) {
    %c0_i32 = arith.constant 0 : i32
    %c0_i32_0 = arith.constant 0 : i32
    %c0_i32_1 = arith.constant 0 : i32
    return %arg0, %c0_i32, %c0_i32_0 : i32, i32, i32
  }
}

</mosaic_0001>

<llo_original>
// kernel: basenet_forward.1
$region0: #{basenet_forward.1}
  #allocation0 [shape = 'u32[]', space=smem, size = 0x4, offset = 0x4, fixed_abs, tag = 'smem constant byte address 0x4 - core index']
  #allocation1 [shape = 'u32[144,128]{1,0:T(1,128)}', space=vmem, size = 0x12000, scoped, tag = 'internal scratch']
  %s0 = inlined_call_operand.vmem [shape: bf16[8,136,512], index: 0, kind: input, shape index: {}]
  %s1 = inlined_call_operand.vmem [shape: bf16[5,512,128], index: 1, kind: input, shape index: {}]
  %s2 = inlined_call_operand.vmem [shape: f32[1,128], index: 2, kind: input, shape index: {}]
  %s3 = inlined_call_operand.vmem [shape: f32[10,104], index: 3, kind: input, shape index: {}]
  %s4 = inlined_call_operand.vmem [shape: f32[8,10,128], index: 4, kind: output, shape index: {}]
  %s5 = sld [smem:[#allocation0]]
  $region56: #{basenet_forward.1} parent=0
    _
  %s7 = ssub.s32 1, %s5
  %s8 = scalar_select 0, %s7, %s5
  loop: start=0, step=1, limit=4
  $region2: #{basenet_forward.1} parent=0 // loop_pre_header
    _
  $region3: #{basenet_forward.1} parent=0 // loop_header
    %s10 = sphi 0, %s14
    %p11 = scmp.ge.s32.totalorder %s10, 4
    %s20 = sphi 0, %s22
    %s23 = sphi 0, %s20
    %s24 = sphi 0, %s23
    %s40 = sphi 0, %s24
    %s44 = sphi 0, %s44
    %s46 = sphi 0, %s44
    %s47 = sphi 0, %s46
    %s61 = sphi 0, %s47
    %s65 = sphi 0, %s65
    %s67 = sphi 0, %s65
    %s68 = sphi 0, %s67
    %s82 = sphi 0, %s68
    %s86 = sphi 0, %s86
    %s88 = sphi 0, %s86
    %s89 = sphi 0, %s88
    %s103 = sphi 0, %s89
    %s109 = sphi 0, %s111
    %s112 = sphi 0, %s109
    %s113 = sphi 0, %s112
    %s129 = sphi 0, %s113
  $region4: #{basenet_forward.1} parent=0 // loop_header_branch
    %13 = sbr.rel (%p11) target = $region8
  $region5: #{basenet_forward.1} parent=0 // loop_body
    %s15 = ssub.s32 %s10, 1
    %s16 = ssub.s32 %s10, 2
    %s17 = sadd.s32 %s10, 1
    %s18 = ssub.s32 %s10, %s17
    %p19 = scmp.eq.s32.totalorder %s18, 0
    %s21 = sadd.s32 %s20, 1
    %s22 = scalar_select %p19, %s20, %s21
    %p25 = pneg %p19
    %p26 = scmp.eq.s32.totalorder %s10, 1
    %p27 = por %p25, %p26
    %p28 = scmp.ne.s32.totalorder %s20, %s23
    %p29 = scmp.eq.s32.totalorder %s10, 0
    %p30 = por %p28, %p29
    %p31 = scmp.ne.s32.totalorder %s20, %s23
    %p32 = scmp.eq.s32.totalorder %s15, 1
    %p33 = por %p31, %p32
    %p34 = scmp.ne.s32.totalorder %s23, %s24
    %p35 = scmp.eq.s32.totalorder %s15, 0
    %p36 = por %p34, %p35
    %p37 = scmp.ne.s32.totalorder %s23, %s24
    %p38 = scmp.eq.s32.totalorder %s16, 1
    %p39 = por %p37, %p38
    %p41 = scmp.ne.s32.totalorder %s24, %s40
    %p42 = scmp.eq.s32.totalorder %s16, 0
    %p43 = por %p41, %p42
    %s45 = sadd.s32 %s44, 1
    %p48 = scmp.eq.s32.totalorder %s10, 1
    %p49 = scmp.ne.s32.totalorder %s44, %s46
    %p50 = scmp.eq.s32.totalorder %s10, 0
    %p51 = por %p49, %p50
    %p52 = scmp.ne.s32.totalorder %s44, %s46
    %p53 = scmp.eq.s32.totalorder %s15, 1
    %p54 = por %p52, %p53
    %p55 = scmp.ne.s32.totalorder %s46, %s47
    %p56 = scmp.eq.s32.totalorder %s15, 0
    %p57 = por %p55, %p56
    %p58 = scmp.ne.s32.totalorder %s46, %s47
    %p59 = scmp.eq.s32.totalorder %s16, 1
    %p60 = por %p58, %p59
    %p62 = scmp.ne.s32.totalorder %s47, %s61
    %p63 = scmp.eq.s32.totalorder %s16, 0
    %p64 = por %p62, %p63
    %s66 = sadd.s32 %s65, 1
    %p69 = scmp.eq.s32.totalorder %s10, 1
    %p70 = scmp.ne.s32.totalorder %s65, %s67
    %p71 = scmp.eq.s32.totalorder %s10, 0
    %p72 = por %p70, %p71
    %p73 = scmp.ne.s32.totalorder %s65, %s67
    %p74 = scmp.eq.s32.totalorder %s15, 1
    %p75 = por %p73, %p74
    %p76 = scmp.ne.s32.totalorder %s67, %s68
    %p77 = scmp.eq.s32.totalorder %s15, 0
    %p78 = por %p76, %p77
    %p79 = scmp.ne.s32.totalorder %s67, %s68
    %p80 = scmp.eq.s32.totalorder %s16, 1
    %p81 = por %p79, %p80
    %p83 = scmp.ne.s32.totalorder %s68, %s82
    %p84 = scmp.eq.s32.totalorder %s16, 0
    %p85 = por %p83, %p84
    %s87 = sadd.s32 %s86, 1
    %p90 = scmp.eq.s32.totalorder %s10, 1
    %p91 = scmp.ne.s32.totalorder %s86, %s88
    %p92 = scmp.eq.s32.totalorder %s10, 0
    %p93 = por %p91, %p92
    %p94 = scmp.ne.s32.totalorder %s86, %s88
    %p95 = scmp.eq.s32.totalorder %s15, 1
    %p96 = por %p94, %p95
    %p97 = scmp.ne.s32.totalorder %s88, %s89
    %p98 = scmp.eq.s32.totalorder %s15, 0
    %p99 = por %p97, %p98
    %p100 = scmp.ne.s32.totalorder %s88, %s89
    %p101 = scmp.eq.s32.totalorder %s16, 1
    %p102 = por %p100, %p101
    %p104 = scmp.ne.s32.totalorder %s89, %s103
    %p105 = scmp.eq.s32.totalorder %s16, 0
    %p106 = por %p104, %p105
    %s107 = ssub.s32 %s10, %s17
    %p108 = scmp.eq.s32.totalorder %s107, 0
    %s110 = sadd.s32 %s109, 1
    %s111 = scalar_select %p108, %s109, %s110
    %p114 = pneg %p108
    %p115 = scmp.eq.s32.totalorder %s10, 1
    %p116 = por %p114, %p115
    %p117 = scmp.ne.s32.totalorder %s109, %s112
    %p118 = scmp.eq.s32.totalorder %s10, 0
    %p119 = por %p117, %p118
    %p120 = scmp.ne.s32.totalorder %s109, %s112
    %p121 = scmp.eq.s32.totalorder %s15, 1
    %p122 = por %p120, %p121
    %p123 = scmp.ne.s32.totalorder %s112, %s113
    %p124 = scmp.eq.s32.totalorder %s15, 0
    %p125 = por %p123, %p124
    %p126 = scmp.ne.s32.totalorder %s112, %s113
    %p127 = scmp.eq.s32.totalorder %s16, 1
    %p128 = por %p126, %p127
    %p130 = scmp.ne.s32.totalorder %s113, %s129
    %p131 = scmp.eq.s32.totalorder %s16, 0
    %p132 = por %p130, %p131
    %p133 = scmp.le.s32.totalorder 1, %s10
    %p134 = scmp.lt.s32.totalorder %s10, 3
    %p135 = pnand %p133, %p134
    %p136 = pneg %p135
    // Predicated region
    $region9: #{basenet_forward.1} parent=5 // pred_check
      _
    $region10: #{basenet_forward.1} parent=5 // pred_check_branch
      %138 = sbr.rel (%p135) target = $region12
    $region11: #{basenet_forward.1} parent=5 // pred_region
      %s139 = ssub.s32 %s10, 1
      // Predicated region
      $region13: #{basenet_forward.1} parent=11 // pred_check
        %p140 = pneg %p57
      $region14: #{basenet_forward.1} parent=11 // pred_check_branch
        %142 = sbr.rel (%p140) target = $region16
      $region15: #{basenet_forward.1} parent=11 // pred_region
        _
      $region16: #{basenet_forward.1} parent=11 // pred_fallthru
        _
      // Predicated region
      $region17: #{basenet_forward.1} parent=11 // pred_check
        %p143 = pneg %p78
      $region18: #{basenet_forward.1} parent=11 // pred_check_branch
        %145 = sbr.rel (%p143) target = $region20
      $region19: #{basenet_forward.1} parent=11 // pred_region
        _
      $region20: #{basenet_forward.1} parent=11 // pred_fallthru
        _
      // Predicated region
      $region21: #{basenet_forward.1} parent=11 // pred_check
        %p146 = pneg %p99
      $region22: #{basenet_forward.1} parent=11 // pred_check_branch
        %148 = sbr.rel (%p146) target = $region24
      $region23: #{basenet_forward.1} parent=11 // pred_region
        _
      $region24: #{basenet_forward.1} parent=11 // pred_fallthru
        _
    $region12: #{basenet_forward.1} parent=5 // pred_fallthru
      _
    %p149 = scmp.lt.s32.totalorder %s10, 2
    // Predicated region
    $region25: #{basenet_forward.1} parent=5 // pred_check
      %p150 = pneg %p149
    $region26: #{basenet_forward.1} parent=5 // pred_check_branch
      %152 = sbr.rel (%p150) target = $region28
    $region27: #{basenet_forward.1} parent=5 // pred_region
      // Predicated region
      $region29: #{basenet_forward.1} parent=27 // pred_check
        %p153 = pneg %p30
      $region30: #{basenet_forward.1} parent=27 // pred_check_branch
        %155 = sbr.rel (%p153) target = $region32
      $region31: #{basenet_forward.1} parent=27 // pred_region
        %s156 = smul.u32 4, %s10
        %p157 = scmp.lt.s32.totalorder %s156, 7
        %s158 = scalar_select %p157, %s156, 7
        %s159 = smul.addr %s158, 68
        %s160 = smul.addr %s159, 4
        %s161 = scalar_lea.vmem %s0, %s160
        %s162 = smul.u32 4, %s10
      $region32: #{basenet_forward.1} parent=27 // pred_fallthru
        _
    $region28: #{basenet_forward.1} parent=5 // pred_fallthru
      _
    %p163 = scmp.le.s32.totalorder 1, %s10
    %p164 = scmp.lt.s32.totalorder %s10, 3
    %p165 = pnand %p163, %p164
    %p166 = pneg %p165
    // Predicated region
    $region33: #{basenet_forward.1} parent=5 // pred_check
      _
    $region34: #{basenet_forward.1} parent=5 // pred_check_branch
      %168 = sbr.rel (%p165) target = $region36
    $region35: #{basenet_forward.1} parent=5 // pred_region
      %s169 = ssub.s32 %s10, 1
      %s170 = smul.u32 4, %s15
      %p171 = scmp.lt.s32.totalorder %s170, 7
      %s172 = scalar_select %p171, %s170, 7
      %s173 = smul.addr %s172, 68
      %s174 = smul.addr %s173, 4
      %s175 = scalar_lea.vmem %s0, %s174
      %p176 = pneg %p36
      %p177 = pneg %p33
      %p178 = pneg %p57
      %p179 = pneg %p54
      %p180 = pneg %p78
      %p181 = pneg %p75
      %p182 = pneg %p99
      %p183 = pneg %p96
      %p184 = pneg %p125
      %p185 = pneg %p122
      %s186 = smul.u32 4, %s15
      %p187 = scmp.lt.s32.totalorder %s186, 7
      %s188 = scalar_select %p187, %s186, 7
      %s189 = smul.addr %s188, 2
      %s190 = smul.addr %s189, 8
      %s191 = scalar_lea.vmem %s4, %s190
      %s192 = smul.u32 4, %s15
      %p193 = scmp.lt.s32.totalorder %s192, 7
      %s194 = scalar_select %p193, %s192, 7
      %s195 = smul.addr %s194, 68
      %s196 = smul.addr %s195, 4
      %s197 = scalar_lea.vmem %s0, %s196
      %s198 = smul.u32 4, %s15
      %s199 = smul.u32 4, %s15
      %p200 = scmp.lt.s32.totalorder %s199, 7
      %s201 = scalar_select %p200, %s199, 7
      %s202 = smul.addr %s201, 2
      %s203 = smul.addr %s202, 8
      %s204 = scalar_lea.vmem %s4, %s203
      %s205 = smul.u32 4, %s15
      %v207 = vld [vmem:[%s2] sm:$0x1]
      %v208 = vld [vmem:[%s3] sm:$0xff]
      %v209 = vld [vmem:[%s3 + $0x8] sm:$0x3]
      loop: start=0, step=1, limit=4
      $region37: #{basenet_forward.1} parent=35 // loop_pre_header
        _
      $region38: #{basenet_forward.1} parent=35 // loop_header
        %s211 = sphi 0, %s215
        %p212 = scmp.ge.s32.totalorder %s211, 4
      $region39: #{basenet_forward.1} parent=35 // loop_header_branch
        %214 = sbr.rel (%p212) target = $region43
      $region40: #{basenet_forward.1} parent=35 // loop_body
        %s216 = smul.u32 %s211, 68
        %s217 = smul.addr %s216, 4
        %s218 = scalar_lea.vmem %s197, %s217
        %v219 = vld [vmem:[%s218] sm:$0xff]
        %v220 = vld [vmem:[%s218 + $0x8] sm:$0xff]
        %v221 = vld [vmem:[%s218 + $0x10] sm:$0xff]
        %v222 = vld [vmem:[%s218 + $0x18] sm:$0xff]
        %v223 = vld [vmem:[%s218 + $0x20] sm:$0xff]
        %v224 = vld [vmem:[%s218 + $0x28] sm:$0xff]
        %v225 = vld [vmem:[%s218 + $0x30] sm:$0xff]
        %v226 = vld [vmem:[%s218 + $0x38] sm:$0xff]
        %v227 = vld [vmem:[%s218 + $0x40] sm:$0xff]
        %v228 = vld [vmem:[%s218 + $0x48] sm:$0xff]
        %v229 = vld [vmem:[%s218 + $0x50] sm:$0xff]
        %v230 = vld [vmem:[%s218 + $0x58] sm:$0xff]
        %v231 = vld [vmem:[%s218 + $0x60] sm:$0xff]
        %v232 = vld [vmem:[%s218 + $0x68] sm:$0xff]
        %v233 = vld [vmem:[%s218 + $0x70] sm:$0xff]
        %v234 = vld [vmem:[%s218 + $0x78] sm:$0xff]
        %v235 = vld [vmem:[%s218 + $0x80] sm:$0xff]
        %v236 = vld [vmem:[%s218 + $0x88] sm:$0xff]
        %v237 = vld [vmem:[%s218 + $0x90] sm:$0xff]
        %v238 = vld [vmem:[%s218 + $0x98] sm:$0xff]
        %v239 = vld [vmem:[%s218 + $0xa0] sm:$0xff]
        %v240 = vld [vmem:[%s218 + $0xa8] sm:$0xff]
        %v241 = vld [vmem:[%s218 + $0xb0] sm:$0xff]
        %v242 = vld [vmem:[%s218 + $0xb8] sm:$0xff]
        %v243 = vld [vmem:[%s218 + $0xc0] sm:$0xff]
        %v244 = vld [vmem:[%s218 + $0xc8] sm:$0xff]
        %v245 = vld [vmem:[%s1] sm:$0xf]
        %v246 = vld [vmem:[%s1 + $0x4] sm:$0xf]
        %v247 = vld [vmem:[%s1 + $0x8] sm:$0xf]
        %v248 = vld [vmem:[%s1 + $0xc] sm:$0xf]
        %v249 = vld [vmem:[%s1 + $0x10] sm:$0xf]
        %v250 = vld [vmem:[%s1 + $0x14] sm:$0xf]
        %v251 = vld [vmem:[%s1 + $0x18] sm:$0xf]
        %v252 = vld [vmem:[%s1 + $0x1c] sm:$0xf]
        %v253 = vld [vmem:[%s1 + $0x20] sm:$0xf]
        %v254 = vld [vmem:[%s1 + $0x24] sm:$0xf]
        %v255 = vld [vmem:[%s1 + $0x28] sm:$0xf]
        %v256 = vld [vmem:[%s1 + $0x2c] sm:$0xf]
        %v257 = vld [vmem:[%s1 + $0x30] sm:$0xf]
        %v258 = vld [vmem:[%s1 + $0x34] sm:$0xf]
        %v259 = vld [vmem:[%s1 + $0x38] sm:$0xf]
        %v260 = vld [vmem:[%s1 + $0x3c] sm:$0xf]
        %v261 = vld [vmem:[%s1 + $0x40] sm:$0xf]
        %v262 = vld [vmem:[%s1 + $0x44] sm:$0xf]
        %v263 = vld [vmem:[%s1 + $0x48] sm:$0xf]
        %v264 = vld [vmem:[%s1 + $0x4c] sm:$0xf]
        %v265 = vld [vmem:[%s1 + $0x50] sm:$0xf]
        %v266 = vld [vmem:[%s1 + $0x54] sm:$0xf]
        %v267 = vld [vmem:[%s1 + $0x58] sm:$0xf]
        %v268 = vld [vmem:[%s1 + $0x5c] sm:$0xf]
        %v269 = vld [vmem:[%s1 + $0x60] sm:$0xf]
        %v270 = vld [vmem:[%s1 + $0x64] sm:$0xf]
        %v271 = vld [vmem:[%s1 + $0x68] sm:$0xf]
        %v272 = vld [vmem:[%s1 + $0x6c] sm:$0xf]
        %v273 = vld [vmem:[%s1 + $0x70] sm:$0xf]
        %v274 = vld [vmem:[%s1 + $0x74] sm:$0xf]
        %v275 = vld [vmem:[%s1 + $0x78] sm:$0xf]
        %v276 = vld [vmem:[%s1 + $0x7c] sm:$0xf]
        %v277 = vld [vmem:[%s1 + $0x80] sm:$0xf]
        %v278 = vld [vmem:[%s1 + $0x84] sm:$0xf]
        %v279 = vld [vmem:[%s1 + $0x88] sm:$0xf]
        %v280 = vld [vmem:[%s1 + $0x8c] sm:$0xf]
        %v281 = vld [vmem:[%s1 + $0x90] sm:$0xf]
        %v282 = vld [vmem:[%s1 + $0x94] sm:$0xf]
        %v283 = vld [vmem:[%s1 + $0x98] sm:$0xf]
        %v284 = vld [vmem:[%s1 + $0x9c] sm:$0xf]
        %v285 = vld [vmem:[%s1 + $0xa0] sm:$0xf]
        %v286 = vld [vmem:[%s1 + $0xa4] sm:$0xf]
        %v287 = vld [vmem:[%s1 + $0xa8] sm:$0xf]
        %v288 = vld [vmem:[%s1 + $0xac] sm:$0xf]
        %v289 = vld [vmem:[%s1 + $0xb0] sm:$0xf]
        %v290 = vld [vmem:[%s1 + $0xb4] sm:$0xf]
        %v291 = vld [vmem:[%s1 + $0xb8] sm:$0xf]
        %v292 = vld [vmem:[%s1 + $0xbc] sm:$0xf]
        %v293 = vld [vmem:[%s1 + $0xc0] sm:$0xf]
        %v294 = vld [vmem:[%s1 + $0xc4] sm:$0xf]
        %v295 = vld [vmem:[%s1 + $0xc8] sm:$0xf]
        %v296 = vld [vmem:[%s1 + $0xcc] sm:$0xf]
        %v297 = vld [vmem:[%s1 + $0xd0] sm:$0xf]
        %v298 = vld [vmem:[%s1 + $0xd4] sm:$0xf]
        %v299 = vld [vmem:[%s1 + $0xd8] sm:$0xf]
        %v300 = vld [vmem:[%s1 + $0xdc] sm:$0xf]
        %v301 = vld [vmem:[%s1 + $0xe0] sm:$0xf]
        %v302 = vld [vmem:[%s1 + $0xe4] sm:$0xf]
        %v303 = vld [vmem:[%s1 + $0xe8] sm:$0xf]
        %v304 = vld [vmem:[%s1 + $0xec] sm:$0xf]
        %v305 = vld [vmem:[%s1 + $0xf0] sm:$0xf]
        %v306 = vld [vmem:[%s1 + $0xf4] sm:$0xf]
        %v307 = vld [vmem:[%s1 + $0xf8] sm:$0xf]
        %v308 = vld [vmem:[%s1 + $0xfc] sm:$0xf]
        %v309 = vld [vmem:[%s218 + $0xd0] sm:$0xff]
        %v310 = vld [vmem:[%s218 + $0xd8] sm:$0xff]
        %s311 = scalar_lea.vmem %s1, 256
        %v312 = vld [vmem:[%s311] sm:$0xf]
        %v313 = vld [vmem:[%s311 + $0x4] sm:$0xf]
        %v314 = vld [vmem:[%s311 + $0x8] sm:$0xf]
        %v315 = vld [vmem:[%s311 + $0xc] sm:$0xf]
        %v316 = vld [vmem:[%s311 + $0x10] sm:$0xf]
        %v317 = vld [vmem:[%s311 + $0x14] sm:$0xf]
        %v318 = vld [vmem:[%s311 + $0x18] sm:$0xf]
        %v319 = vld [vmem:[%s311 + $0x1c] sm:$0xf]
        %v320 = vld [vmem:[%s311 + $0x20] sm:$0xf]
        %v321 = vld [vmem:[%s311 + $0x24] sm:$0xf]
        %v322 = vld [vmem:[%s311 + $0x28] sm:$0xf]
        %v323 = vld [vmem:[%s311 + $0x2c] sm:$0xf]
        %v324 = vld [vmem:[%s311 + $0x30] sm:$0xf]
        %v325 = vld [vmem:[%s311 + $0x34] sm:$0xf]
        %v326 = vld [vmem:[%s311 + $0x38] sm:$0xf]
        %v327 = vld [vmem:[%s311 + $0x3c] sm:$0xf]
        %v328 = vld [vmem:[%s311 + $0x40] sm:$0xf]
        %v329 = vld [vmem:[%s311 + $0x44] sm:$0xf]
        %v330 = vld [vmem:[%s311 + $0x48] sm:$0xf]
        %v331 = vld [vmem:[%s311 + $0x4c] sm:$0xf]
        %v332 = vld [vmem:[%s311 + $0x50] sm:$0xf]
        %v333 = vld [vmem:[%s311 + $0x54] sm:$0xf]
        %v334 = vld [vmem:[%s311 + $0x58] sm:$0xf]
        %v335 = vld [vmem:[%s311 + $0x5c] sm:$0xf]
        %v336 = vld [vmem:[%s311 + $0x60] sm:$0xf]
        %v337 = vld [vmem:[%s311 + $0x64] sm:$0xf]
        %v338 = vld [vmem:[%s311 + $0x68] sm:$0xf]
        %v339 = vld [vmem:[%s311 + $0x6c] sm:$0xf]
        %v340 = vld [vmem:[%s311 + $0x70] sm:$0xf]
        %v341 = vld [vmem:[%s311 + $0x74] sm:$0xf]
        %v342 = vld [vmem:[%s311 + $0x78] sm:$0xf]
        %v343 = vld [vmem:[%s311 + $0x7c] sm:$0xf]
        %v344 = vld [vmem:[%s311 + $0x80] sm:$0xf]
        %v345 = vld [vmem:[%s311 + $0x84] sm:$0xf]
        %v346 = vld [vmem:[%s311 + $0x88] sm:$0xf]
        %v347 = vld [vmem:[%s311 + $0x8c] sm:$0xf]
        %v348 = vld [vmem:[%s311 + $0x90] sm:$0xf]
        %v349 = vld [vmem:[%s311 + $0x94] sm:$0xf]
        %v350 = vld [vmem:[%s311 + $0x98] sm:$0xf]
        %v351 = vld [vmem:[%s311 + $0x9c] sm:$0xf]
        %v352 = vld [vmem:[%s311 + $0xa0] sm:$0xf]
        %v353 = vld [vmem:[%s311 + $0xa4] sm:$0xf]
        %v354 = vld [vmem:[%s311 + $0xa8] sm:$0xf]
        %v355 = vld [vmem:[%s311 + $0xac] sm:$0xf]
        %v356 = vld [vmem:[%s311 + $0xb0] sm:$0xf]
        %v357 = vld [vmem:[%s311 + $0xb4] sm:$0xf]
        %v358 = vld [vmem:[%s311 + $0xb8] sm:$0xf]
        %v359 = vld [vmem:[%s311 + $0xbc] sm:$0xf]
        %v360 = vld [vmem:[%s311 + $0xc0] sm:$0xf]
        %v361 = vld [vmem:[%s311 + $0xc4] sm:$0xf]
        %v362 = vld [vmem:[%s311 + $0xc8] sm:$0xf]
        %v363 = vld [vmem:[%s311 + $0xcc] sm:$0xf]
        %v364 = vld [vmem:[%s311 + $0xd0] sm:$0xf]
        %v365 = vld [vmem:[%s311 + $0xd4] sm:$0xf]
        %v366 = vld [vmem:[%s311 + $0xd8] sm:$0xf]
        %v367 = vld [vmem:[%s311 + $0xdc] sm:$0xf]
        %v368 = vld [vmem:[%s311 + $0xe0] sm:$0xf]
        %v369 = vld [vmem:[%s311 + $0xe4] sm:$0xf]
        %v370 = vld [vmem:[%s311 + $0xe8] sm:$0xf]
        %v371 = vld [vmem:[%s311 + $0xec] sm:$0xf]
        %v372 = vld [vmem:[%s311 + $0xf0] sm:$0xf]
        %v373 = vld [vmem:[%s311 + $0xf4] sm:$0xf]
        %v374 = vld [vmem:[%s311 + $0xf8] sm:$0xf]
        %v375 = vld [vmem:[%s311 + $0xfc] sm:$0xf]
        %v402 = vunpack.c.l.b16 %v221
        %v403 = vunpack.c.h.b16 %v221
        %v404 = vunpack.c.l.b16 %v222
        %v405 = vunpack.c.h.b16 %v222
        %v406 = vunpack.c.l.b16 %v223
        %v407 = vunpack.c.h.b16 %v223
        %v408 = vunpack.c.l.b16 %v224
        %v409 = vunpack.c.h.b16 %v224
        %v410 = vunpack.c.l.b16 %v225
        %v411 = vunpack.c.h.b16 %v225
        %v412 = vunpack.c.l.b16 %v226
        %v413 = vunpack.c.h.b16 %v226
        %v414 = vunpack.c.l.b16 %v227
        %v415 = vunpack.c.h.b16 %v227
        %v416 = vunpack.c.l.b16 %v228
        %v417 = vunpack.c.h.b16 %v228
        %v418 = vunpack.c.l.b16 %v229
        %v419 = vunpack.c.h.b16 %v229
        %v420 = vunpack.c.l.b16 %v230
        %v421 = vunpack.c.h.b16 %v230
        %v422 = vunpack.c.l.b16 %v231
        %v423 = vunpack.c.h.b16 %v231
        %v424 = vunpack.c.l.b16 %v232
        %v425 = vunpack.c.h.b16 %v232
        %v426 = vunpack.c.l.b16 %v233
        %v427 = vunpack.c.h.b16 %v233
        %v428 = vunpack.c.l.b16 %v234
        %v429 = vunpack.c.h.b16 %v234
        %v430 = vunpack.c.l.b16 %v235
        %v431 = vunpack.c.h.b16 %v235
        %v432 = vunpack.c.l.b16 %v236
        %v433 = vunpack.c.h.b16 %v236
        %v434 = vunpack.c.l.b16 %v237
        %v435 = vunpack.c.h.b16 %v237
        %v436 = vunpack.c.l.b16 %v238
        %v437 = vunpack.c.h.b16 %v238
        %v438 = vunpack.c.l.b16 %v239
        %v439 = vunpack.c.h.b16 %v239
        %v440 = vunpack.c.l.b16 %v240
        %v441 = vunpack.c.h.b16 %v240
        %v442 = vunpack.c.l.b16 %v241
        %v443 = vunpack.c.h.b16 %v241
        %v444 = vunpack.c.l.b16 %v242
        %v445 = vunpack.c.h.b16 %v242
        %v446 = vunpack.c.l.b16 %v243
        %v447 = vunpack.c.h.b16 %v243
        %v448 = vunpack.c.l.b16 %v244
        %v449 = vunpack.c.h.b16 %v244
        %v450 = vunpack.c.l.b16 %v309
        %v451 = vunpack.c.h.b16 %v309
        %v452 = vunpack.c.l.b16 %v310
        %v453 = vunpack.c.h.b16 %v310
        %v454 = vpack.c.b16 %v406, %v402
        %v455 = vpack.c.b16 %v407, %v403
        %v456 = vpack.c.b16 %v408, %v404
        %v457 = vpack.c.b16 %v409, %v405
        %v458 = vpack.c.b16 %v414, %v410
        %v459 = vpack.c.b16 %v415, %v411
        %v460 = vpack.c.b16 %v416, %v412
        %v461 = vpack.c.b16 %v417, %v413
        %v462 = vpack.c.b16 %v422, %v418
        %v463 = vpack.c.b16 %v423, %v419
        %v464 = vpack.c.b16 %v424, %v420
        %v465 = vpack.c.b16 %v425, %v421
        %v466 = vpack.c.b16 %v430, %v426
        %v467 = vpack.c.b16 %v431, %v427
        %v468 = vpack.c.b16 %v432, %v428
        %v469 = vpack.c.b16 %v433, %v429
        %v470 = vpack.c.b16 %v438, %v434
        %v471 = vpack.c.b16 %v439, %v435
        %v472 = vpack.c.b16 %v440, %v436
        %v473 = vpack.c.b16 %v441, %v437
        %v474 = vpack.c.b16 %v446, %v442
        %v475 = vpack.c.b16 %v447, %v443
        %v476 = vpack.c.b16 %v448, %v444
        %v477 = vpack.c.b16 %v449, %v445
        %v478 = vpack.c.b16 %v450, %v450
        %v479 = vpack.c.b16 %v451, %v451
        %v480 = vpack.c.b16 %v452, %v452
        %v481 = vpack.c.b16 %v453, %v453
        %v574 = vunpack.c.l.b16 %v312
        %v575 = vunpack.c.l.b16 %v313
        %v576 = vunpack.c.l.b16 %v314
        %v577 = vunpack.c.l.b16 %v315
        %v578 = vunpack.c.l.b16 %v316
        %v579 = vunpack.c.l.b16 %v317
        %v580 = vunpack.c.l.b16 %v318
        %v581 = vunpack.c.l.b16 %v319
        %v582 = vunpack.c.l.b16 %v320
        %v583 = vunpack.c.l.b16 %v321
        %v584 = vunpack.c.l.b16 %v322
        %v585 = vunpack.c.l.b16 %v323
        %v586 = vunpack.c.l.b16 %v324
        %v587 = vunpack.c.l.b16 %v325
        %v588 = vunpack.c.l.b16 %v326
        %v589 = vunpack.c.l.b16 %v327
        %v590 = vunpack.c.l.b16 %v328
        %v591 = vunpack.c.l.b16 %v329
        %v592 = vunpack.c.l.b16 %v330
        %v593 = vunpack.c.l.b16 %v331
        %v594 = vunpack.c.l.b16 %v332
        %v595 = vunpack.c.l.b16 %v333
        %v596 = vunpack.c.l.b16 %v334
        %v597 = vunpack.c.l.b16 %v335
        %v598 = vunpack.c.l.b16 %v336
        %v599 = vunpack.c.l.b16 %v337
        %v600 = vunpack.c.l.b16 %v338
        %v601 = vunpack.c.l.b16 %v339
        %v602 = vunpack.c.l.b16 %v340
        %v603 = vunpack.c.l.b16 %v341
        %v604 = vunpack.c.l.b16 %v342
        %v605 = vunpack.c.l.b16 %v343
        %v606 = vunpack.c.l.b16 %v344
        %v607 = vunpack.c.l.b16 %v345
        %v608 = vunpack.c.l.b16 %v346
        %v609 = vunpack.c.l.b16 %v347
        %v610 = vunpack.c.l.b16 %v348
        %v611 = vunpack.c.l.b16 %v349
        %v612 = vunpack.c.l.b16 %v350
        %v613 = vunpack.c.l.b16 %v351
        %v614 = vunpack.c.l.b16 %v352
        %v615 = vunpack.c.l.b16 %v353
        %v616 = vunpack.c.l.b16 %v354
        %v617 = vunpack.c.l.b16 %v355
        %v618 = vunpack.c.l.b16 %v356
        %v619 = vunpack.c.l.b16 %v357
        %v620 = vunpack.c.l.b16 %v358
        %v621 = vunpack.c.l.b16 %v359
        %v622 = vunpack.c.l.b16 %v360
        %v623 = vunpack.c.l.b16 %v361
        %v624 = vunpack.c.l.b16 %v362
        %v625 = vunpack.c.l.b16 %v363
        %v626 = vunpack.c.l.b16 %v364
        %v627 = vunpack.c.l.b16 %v365
        %v628 = vunpack.c.l.b16 %v366
        %v629 = vunpack.c.l.b16 %v367
        %v630 = vunpack.c.l.b16 %v368
        %v631 = vunpack.c.l.b16 %v369
        %v632 = vunpack.c.l.b16 %v370
        %v633 = vunpack.c.l.b16 %v371
        %v634 = vunpack.c.l.b16 %v372
        %v635 = vunpack.c.l.b16 %v373
        %v636 = vunpack.c.l.b16 %v374
        %v637 = vunpack.c.l.b16 %v375
        %v638 = vpack.c.b16 %v575, %v574
        %v639 = vpack.c.b16 %v577, %v576
        %v640 = vpack.c.b16 %v579, %v578
        %v641 = vpack.c.b16 %v581, %v580
        %v642 = vpack.c.b16 %v583, %v582
        %v643 = vpack.c.b16 %v585, %v584
        %v644 = vpack.c.b16 %v587, %v586
        %v645 = vpack.c.b16 %v589, %v588
        %v646 = vpack.c.b16 %v591, %v590
        %v647 = vpack.c.b16 %v593, %v592
        %v648 = vpack.c.b16 %v595, %v594
        %v649 = vpack.c.b16 %v597, %v596
        %v650 = vpack.c.b16 %v599, %v598
        %v651 = vpack.c.b16 %v601, %v600
        %v652 = vpack.c.b16 %v603, %v602
        %v653 = vpack.c.b16 %v605, %v604
        %v654 = vpack.c.b16 %v607, %v606
        %v655 = vpack.c.b16 %v609, %v608
        %v656 = vpack.c.b16 %v611, %v610
        %v657 = vpack.c.b16 %v613, %v612
        %v658 = vpack.c.b16 %v615, %v614
        %v659 = vpack.c.b16 %v617, %v616
        %v660 = vpack.c.b16 %v619, %v618
        %v661 = vpack.c.b16 %v621, %v620
        %v662 = vpack.c.b16 %v623, %v622
        %v663 = vpack.c.b16 %v625, %v624
        %v664 = vpack.c.b16 %v627, %v626
        %v665 = vpack.c.b16 %v629, %v628
        %v666 = vpack.c.b16 %v631, %v630
        %v667 = vpack.c.b16 %v633, %v632
        %v668 = vpack.c.b16 %v635, %v634
        %v669 = vpack.c.b16 %v637, %v636
        %702 = vmatprep.subr.bf16.mxu0 0
        %703 = vmatpush1.bf16.msra.mxu0 %v645
        %704 = vmatprep.subr.bf16.mxu0 0
        %705 = vmatpush1.bf16.msra.mxu0 %v644
        %706 = vmatprep.subr.bf16.mxu0 0
        %707 = vmatpush1.bf16.msra.mxu0 %v643
        %708 = vmatprep.subr.bf16.mxu0 0
        %709 = vmatpush1.bf16.msra.mxu0 %v642
        %710 = vmatprep.subr.bf16.mxu0 0
        %711 = vmatpush1.bf16.msra.mxu0 %v641
        %712 = vmatprep.subr.bf16.mxu0 0
        %713 = vmatpush1.bf16.msra.mxu0 %v640
        %714 = vmatprep.subr.bf16.mxu0 0
        %715 = vmatpush1.bf16.msra.mxu0 %v639
        %716 = vmatprep.subr.bf16.mxu0 0
        %717 = vmatpush1.bf16.msra.mxu0 %v638
        %718 = vmatprep.subr.bf16.mxu0 0
        %719 = vmatpush2.bf16.msra.mxu0 %v653
        %720 = vmatprep.subr.bf16.mxu0 0
        %721 = vmatpush2.bf16.msra.mxu0 %v652
        %722 = vmatprep.subr.bf16.mxu0 0
        %723 = vmatpush2.bf16.msra.mxu0 %v651
        %724 = vmatprep.subr.bf16.mxu0 0
        %725 = vmatpush2.bf16.msra.mxu0 %v650
        %726 = vmatprep.subr.bf16.mxu0 0
        %727 = vmatpush2.bf16.msra.mxu0 %v649
        %728 = vmatprep.subr.bf16.mxu0 0
        %729 = vmatpush2.bf16.msra.mxu0 %v648
        %730 = vmatprep.subr.bf16.mxu0 0
        %731 = vmatpush2.bf16.msra.mxu0 %v647
        %732 = vmatprep.subr.bf16.mxu0 0
        %733 = vmatpush2.bf16.msra.mxu0 %v646
        %734 = vmatprep.mubr.bf16.mxu0 %v455
        %735 = vmatmul.mubr.bf16.gmra.mxu0 %v454
        %v736 = vpop.f32.mrf.mxu0
        %v737 = vadd.f32 0.0, %v736
        %v738 = vpop.f32.mrf.mxu0
        %v739 = vpop.f32.mrf.mxu0
        %v740 = vadd.f32 0.0, %v739
        %v741 = vpop.f32.mrf.mxu0
        %742 = vmatprep.mubr.bf16.mxu0 %v459
        %743 = vmatmul.mubr.bf16.gmra.mxu0 %v458
        %v744 = vpop.f32.mrf.mxu0
        %v745 = vadd.f32 0.0, %v744
        %v746 = vpop.f32.mrf.mxu0
        %v747 = vpop.f32.mrf.mxu0
        %v748 = vadd.f32 0.0, %v747
        %v749 = vpop.f32.mrf.mxu0
        %750 = vmatprep.mubr.bf16.mxu0 %v463
        %751 = vmatmul.mubr.bf16.gmra.mxu0 %v462
        %v752 = vpop.f32.mrf.mxu0
        %v753 = vadd.f32 0.0, %v752
        %v754 = vpop.f32.mrf.mxu0
        %v755 = vpop.f32.mrf.mxu0
        %v756 = vadd.f32 0.0, %v755
        %v757 = vpop.f32.mrf.mxu0
        %758 = vmatprep.mubr.bf16.mxu0 %v467
        %759 = vmatmul.mubr.bf16.gmra.mxu0 %v466
        %v760 = vpop.f32.mrf.mxu0
        %v761 = vadd.f32 0.0, %v760
        %v762 = vpop.f32.mrf.mxu0
        %v763 = vpop.f32.mrf.mxu0
        %v764 = vadd.f32 0.0, %v763
        %v765 = vpop.f32.mrf.mxu0
        %766 = vmatprep.mubr.bf16.mxu0 %v471
        %767 = vmatmul.mubr.bf16.gmra.mxu0 %v470
        %v768 = vpop.f32.mrf.mxu0
        %v769 = vadd.f32 0.0, %v768
        %v770 = vpop.f32.mrf.mxu0
        %v771 = vpop.f32.mrf.mxu0
        %v772 = vadd.f32 0.0, %v771
        %v773 = vpop.f32.mrf.mxu0
        %774 = vmatprep.mubr.bf16.mxu0 %v475
        %775 = vmatmul.mubr.bf16.gmra.mxu0 %v474
        %v776 = vpop.f32.mrf.mxu0
        %v777 = vadd.f32 0.0, %v776
        %v778 = vpop.f32.mrf.mxu0
        %v779 = vpop.f32.mrf.mxu0
        %v780 = vadd.f32 0.0, %v779
        %v781 = vpop.f32.mrf.mxu0
        %782 = vmatprep.mubr.bf16.mxu0 %v479
        %783 = vmatmul.mubr.bf16.gmra.mxu0 %v478
        %v784 = vpop.f32.mrf.mxu0
        %v785 = vadd.f32 0.0, %v784
        %v786 = vpop.f32.mrf.mxu0
        %v787 = vpop.f32.mrf.mxu0
        %v788 = vpop.f32.mrf.mxu0
        %789 = vdwg.mxu0
        %790 = vmatprep.subr.bf16.mxu0 0
        %791 = vmatpush1.bf16.msra.mxu0 %v661
        %792 = vmatprep.subr.bf16.mxu0 0
        %793 = vmatpush1.bf16.msra.mxu0 %v660
        %794 = vmatprep.subr.bf16.mxu0 0
        %795 = vmatpush1.bf16.msra.mxu0 %v659
        %796 = vmatprep.subr.bf16.mxu0 0
        %797 = vmatpush1.bf16.msra.mxu0 %v658
        %798 = vmatprep.subr.bf16.mxu0 0
        %799 = vmatpush1.bf16.msra.mxu0 %v657
        %800 = vmatprep.subr.bf16.mxu0 0
        %801 = vmatpush1.bf16.msra.mxu0 %v656
        %802 = vmatprep.subr.bf16.mxu0 0
        %803 = vmatpush1.bf16.msra.mxu0 %v655
        %804 = vmatprep.subr.bf16.mxu0 0
        %805 = vmatpush1.bf16.msra.mxu0 %v654
        %806 = vmatprep.subr.bf16.mxu0 0
        %807 = vmatpush2.bf16.msra.mxu0 %v669
        %808 = vmatprep.subr.bf16.mxu0 0
        %809 = vmatpush2.bf16.msra.mxu0 %v668
        %810 = vmatprep.subr.bf16.mxu0 0
        %811 = vmatpush2.bf16.msra.mxu0 %v667
        %812 = vmatprep.subr.bf16.mxu0 0
        %813 = vmatpush2.bf16.msra.mxu0 %v666
        %814 = vmatprep.subr.bf16.mxu0 0
        %815 = vmatpush2.bf16.msra.mxu0 %v665
        %816 = vmatprep.subr.bf16.mxu0 0
        %817 = vmatpush2.bf16.msra.mxu0 %v664
        %818 = vmatprep.subr.bf16.mxu0 0
        %819 = vmatpush2.bf16.msra.mxu0 %v663
        %820 = vmatprep.subr.bf16.mxu0 0
        %821 = vmatpush2.bf16.msra.mxu0 %v662
        %822 = vmatprep.mubr.bf16.mxu0 %v457
        %823 = vmatmul.mubr.bf16.gmra.mxu0 %v456
        %v824 = vpop.f32.mrf.mxu0
        %v825 = vadd.f32 %v737, %v824
        %v826 = vpop.f32.mrf.mxu0
        %v827 = vpop.f32.mrf.mxu0
        %v828 = vadd.f32 %v740, %v827
        %v829 = vpop.f32.mrf.mxu0
        %830 = vmatprep.mubr.bf16.mxu0 %v461
        %831 = vmatmul.mubr.bf16.gmra.mxu0 %v460
        %v832 = vpop.f32.mrf.mxu0
        %v833 = vadd.f32 %v745, %v832
        %v834 = vpop.f32.mrf.mxu0
        %v835 = vpop.f32.mrf.mxu0
        %v836 = vadd.f32 %v748, %v835
        %v837 = vpop.f32.mrf.mxu0
        %838 = vmatprep.mubr.bf16.mxu0 %v465
        %839 = vmatmul.mubr.bf16.gmra.mxu0 %v464
        %v840 = vpop.f32.mrf.mxu0
        %v841 = vadd.f32 %v753, %v840
        %v842 = vpop.f32.mrf.mxu0
        %v843 = vpop.f32.mrf.mxu0
        %v844 = vadd.f32 %v756, %v843
        %v845 = vpop.f32.mrf.mxu0
        %846 = vmatprep.mubr.bf16.mxu0 %v469
        %847 = vmatmul.mubr.bf16.gmra.mxu0 %v468
        %v848 = vpop.f32.mrf.mxu0
        %v849 = vadd.f32 %v761, %v848
        %v850 = vpop.f32.mrf.mxu0
        %v851 = vpop.f32.mrf.mxu0
        %v852 = vadd.f32 %v764, %v851
        %v853 = vpop.f32.mrf.mxu0
        %854 = vmatprep.mubr.bf16.mxu0 %v473
        %855 = vmatmul.mubr.bf16.gmra.mxu0 %v472
        %v856 = vpop.f32.mrf.mxu0
        %v857 = vadd.f32 %v769, %v856
        %v858 = vpop.f32.mrf.mxu0
        %v859 = vpop.f32.mrf.mxu0
        %v860 = vadd.f32 %v772, %v859
        %v861 = vpop.f32.mrf.mxu0
        %862 = vmatprep.mubr.bf16.mxu0 %v477
        %863 = vmatmul.mubr.bf16.gmra.mxu0 %v476
        %v864 = vpop.f32.mrf.mxu0
        %v865 = vadd.f32 %v777, %v864
        %v866 = vpop.f32.mrf.mxu0
        %v867 = vpop.f32.mrf.mxu0
        %v868 = vadd.f32 %v780, %v867
        %v869 = vpop.f32.mrf.mxu0
        %870 = vmatprep.mubr.bf16.mxu0 %v481
        %871 = vmatmul.mubr.bf16.gmra.mxu0 %v480
        %v872 = vpop.f32.mrf.mxu0
        %v873 = vadd.f32 %v785, %v872
        %v874 = vpop.f32.mrf.mxu0
        %v875 = vpop.f32.mrf.mxu0
        %v876 = vpop.f32.mrf.mxu0
        %877 = vdwg.mxu0
        %v880 = vunpack.c.l.b16 %v219
        %v881 = vunpack.c.h.b16 %v219
        %v882 = vunpack.c.l.b16 %v220
        %v883 = vunpack.c.h.b16 %v220
        %v884 = vpack.c.b16 %v402, %v880
        %v885 = vpack.c.b16 %v403, %v881
        %v886 = vpack.c.b16 %v404, %v882
        %v887 = vpack.c.b16 %v405, %v883
        %v888 = vpack.c.b16 %v410, %v406
        %v889 = vpack.c.b16 %v411, %v407
        %v890 = vpack.c.b16 %v412, %v408
        %v891 = vpack.c.b16 %v413, %v409
        %v892 = vpack.c.b16 %v418, %v414
        %v893 = vpack.c.b16 %v419, %v415
        %v894 = vpack.c.b16 %v420, %v416
        %v895 = vpack.c.b16 %v421, %v417
        %v896 = vpack.c.b16 %v426, %v422
        %v897 = vpack.c.b16 %v427, %v423
        %v898 = vpack.c.b16 %v428, %v424
        %v899 = vpack.c.b16 %v429, %v425
        %v900 = vpack.c.b16 %v434, %v430
        %v901 = vpack.c.b16 %v435, %v431
        %v902 = vpack.c.b16 %v436, %v432
        %v903 = vpack.c.b16 %v437, %v433
        %v904 = vpack.c.b16 %v442, %v438
        %v905 = vpack.c.b16 %v443, %v439
        %v906 = vpack.c.b16 %v444, %v440
        %v907 = vpack.c.b16 %v445, %v441
        %v908 = vpack.c.b16 %v446, %v446
        %v909 = vpack.c.b16 %v447, %v447
        %v910 = vpack.c.b16 %v448, %v448
        %v911 = vpack.c.b16 %v449, %v449
        %v1004 = vunpack.c.l.b16 %v245
        %v1005 = vunpack.c.l.b16 %v246
        %v1006 = vunpack.c.l.b16 %v247
        %v1007 = vunpack.c.l.b16 %v248
        %v1008 = vunpack.c.l.b16 %v249
        %v1009 = vunpack.c.l.b16 %v250
        %v1010 = vunpack.c.l.b16 %v251
        %v1011 = vunpack.c.l.b16 %v252
        %v1012 = vunpack.c.l.b16 %v253
        %v1013 = vunpack.c.l.b16 %v254
        %v1014 = vunpack.c.l.b16 %v255
        %v1015 = vunpack.c.l.b16 %v256
        %v1016 = vunpack.c.l.b16 %v257
        %v1017 = vunpack.c.l.b16 %v258
        %v1018 = vunpack.c.l.b16 %v259
        %v1019 = vunpack.c.l.b16 %v260
        %v1020 = vunpack.c.l.b16 %v261
        %v1021 = vunpack.c.l.b16 %v262
        %v1022 = vunpack.c.l.b16 %v263
        %v1023 = vunpack.c.l.b16 %v264
        %v1024 = vunpack.c.l.b16 %v265
        %v1025 = vunpack.c.l.b16 %v266
        %v1026 = vunpack.c.l.b16 %v267
        %v1027 = vunpack.c.l.b16 %v268
        %v1028 = vunpack.c.l.b16 %v269
        %v1029 = vunpack.c.l.b16 %v270
        %v1030 = vunpack.c.l.b16 %v271
        %v1031 = vunpack.c.l.b16 %v272
        %v1032 = vunpack.c.l.b16 %v273
        %v1033 = vunpack.c.l.b16 %v274
        %v1034 = vunpack.c.l.b16 %v275
        %v1035 = vunpack.c.l.b16 %v276
        %v1036 = vunpack.c.l.b16 %v277
        %v1037 = vunpack.c.l.b16 %v278
        %v1038 = vunpack.c.l.b16 %v279
        %v1039 = vunpack.c.l.b16 %v280
        %v1040 = vunpack.c.l.b16 %v281
        %v1041 = vunpack.c.l.b16 %v282
        %v1042 = vunpack.c.l.b16 %v283
        %v1043 = vunpack.c.l.b16 %v284
        %v1044 = vunpack.c.l.b16 %v285
        %v1045 = vunpack.c.l.b16 %v286
        %v1046 = vunpack.c.l.b16 %v287
        %v1047 = vunpack.c.l.b16 %v288
        %v1048 = vunpack.c.l.b16 %v289
        %v1049 = vunpack.c.l.b16 %v290
        %v1050 = vunpack.c.l.b16 %v291
        %v1051 = vunpack.c.l.b16 %v292
        %v1052 = vunpack.c.l.b16 %v293
        %v1053 = vunpack.c.l.b16 %v294
        %v1054 = vunpack.c.l.b16 %v295
        %v1055 = vunpack.c.l.b16 %v296
        %v1056 = vunpack.c.l.b16 %v297
        %v1057 = vunpack.c.l.b16 %v298
        %v1058 = vunpack.c.l.b16 %v299
        %v1059 = vunpack.c.l.b16 %v300
        %v1060 = vunpack.c.l.b16 %v301
        %v1061 = vunpack.c.l.b16 %v302
        %v1062 = vunpack.c.l.b16 %v303
        %v1063 = vunpack.c.l.b16 %v304
        %v1064 = vunpack.c.l.b16 %v305
        %v1065 = vunpack.c.l.b16 %v306
        %v1066 = vunpack.c.l.b16 %v307
        %v1067 = vunpack.c.l.b16 %v308
        %v1068 = vpack.c.b16 %v1005, %v1004
        %v1069 = vpack.c.b16 %v1007, %v1006
        %v1070 = vpack.c.b16 %v1009, %v1008
        %v1071 = vpack.c.b16 %v1011, %v1010
        %v1072 = vpack.c.b16 %v1013, %v1012
        %v1073 = vpack.c.b16 %v1015, %v1014
        %v1074 = vpack.c.b16 %v1017, %v1016
        %v1075 = vpack.c.b16 %v1019, %v1018
        %v1076 = vpack.c.b16 %v1021, %v1020
        %v1077 = vpack.c.b16 %v1023, %v1022
        %v1078 = vpack.c.b16 %v1025, %v1024
        %v1079 = vpack.c.b16 %v1027, %v1026
        %v1080 = vpack.c.b16 %v1029, %v1028
        %v1081 = vpack.c.b16 %v1031, %v1030
        %v1082 = vpack.c.b16 %v1033, %v1032
        %v1083 = vpack.c.b16 %v1035, %v1034
        %v1084 = vpack.c.b16 %v1037, %v1036
        %v1085 = vpack.c.b16 %v1039, %v1038
        %v1086 = vpack.c.b16 %v1041, %v1040
        %v1087 = vpack.c.b16 %v1043, %v1042
        %v1088 = vpack.c.b16 %v1045, %v1044
        %v1089 = vpack.c.b16 %v1047, %v1046
        %v1090 = vpack.c.b16 %v1049, %v1048
        %v1091 = vpack.c.b16 %v1051, %v1050
        %v1092 = vpack.c.b16 %v1053, %v1052
        %v1093 = vpack.c.b16 %v1055, %v1054
        %v1094 = vpack.c.b16 %v1057, %v1056
        %v1095 = vpack.c.b16 %v1059, %v1058
        %v1096 = vpack.c.b16 %v1061, %v1060
        %v1097 = vpack.c.b16 %v1063, %v1062
        %v1098 = vpack.c.b16 %v1065, %v1064
        %v1099 = vpack.c.b16 %v1067, %v1066
        %1132 = vmatprep.subr.bf16.mxu0 0
        %1133 = vmatpush1.bf16.msra.mxu0 %v1075
        %1134 = vmatprep.subr.bf16.mxu0 0
        %1135 = vmatpush1.bf16.msra.mxu0 %v1074
        %1136 = vmatprep.subr.bf16.mxu0 0
        %1137 = vmatpush1.bf16.msra.mxu0 %v1073
        %1138 = vmatprep.subr.bf16.mxu0 0
        %1139 = vmatpush1.bf16.msra.mxu0 %v1072
        %1140 = vmatprep.subr.bf16.mxu0 0
        %1141 = vmatpush1.bf16.msra.mxu0 %v1071
        %1142 = vmatprep.subr.bf16.mxu0 0
        %1143 = vmatpush1.bf16.msra.mxu0 %v1070
        %1144 = vmatprep.subr.bf16.mxu0 0
        %1145 = vmatpush1.bf16.msra.mxu0 %v1069
        %1146 = vmatprep.subr.bf16.mxu0 0
        %1147 = vmatpush1.bf16.msra.mxu0 %v1068
        %1148 = vmatprep.subr.bf16.mxu0 0
        %1149 = vmatpush2.bf16.msra.mxu0 %v1083
        %1150 = vmatprep.subr.bf16.mxu0 0
        %1151 = vmatpush2.bf16.msra.mxu0 %v1082
        %1152 = vmatprep.subr.bf16.mxu0 0
        %1153 = vmatpush2.bf16.msra.mxu0 %v1081
        %1154 = vmatprep.subr.bf16.mxu0 0
        %1155 = vmatpush2.bf16.msra.mxu0 %v1080
        %1156 = vmatprep.subr.bf16.mxu0 0
        %1157 = vmatpush2.bf16.msra.mxu0 %v1079
        %1158 = vmatprep.subr.bf16.mxu0 0
        %1159 = vmatpush2.bf16.msra.mxu0 %v1078
        %1160 = vmatprep.subr.bf16.mxu0 0
        %1161 = vmatpush2.bf16.msra.mxu0 %v1077
        %1162 = vmatprep.subr.bf16.mxu0 0
        %1163 = vmatpush2.bf16.msra.mxu0 %v1076
        %1164 = vmatprep.mubr.bf16.mxu0 %v885
        %1165 = vmatmul.mubr.bf16.gmra.mxu0 %v884
        %v1166 = vpop.f32.mrf.mxu0
        %v1167 = vadd.f32 %v825, %v1166
        %v1168 = vpop.f32.mrf.mxu0
        %v1169 = vpop.f32.mrf.mxu0
        %v1170 = vadd.f32 %v828, %v1169
        %v1171 = vpop.f32.mrf.mxu0
        %1172 = vmatprep.mubr.bf16.mxu0 %v889
        %1173 = vmatmul.mubr.bf16.gmra.mxu0 %v888
        %v1174 = vpop.f32.mrf.mxu0
        %v1175 = vadd.f32 %v833, %v1174
        %v1176 = vpop.f32.mrf.mxu0
        %v1177 = vpop.f32.mrf.mxu0
        %v1178 = vadd.f32 %v836, %v1177
        %v1179 = vpop.f32.mrf.mxu0
        %1180 = vmatprep.mubr.bf16.mxu0 %v893
        %1181 = vmatmul.mubr.bf16.gmra.mxu0 %v892
        %v1182 = vpop.f32.mrf.mxu0
        %v1183 = vadd.f32 %v841, %v1182
        %v1184 = vpop.f32.mrf.mxu0
        %v1185 = vpop.f32.mrf.mxu0
        %v1186 = vadd.f32 %v844, %v1185
        %v1187 = vpop.f32.mrf.mxu0
        %1188 = vmatprep.mubr.bf16.mxu0 %v897
        %1189 = vmatmul.mubr.bf16.gmra.mxu0 %v896
        %v1190 = vpop.f32.mrf.mxu0
        %v1191 = vadd.f32 %v849, %v1190
        %v1192 = vpop.f32.mrf.mxu0
        %v1193 = vpop.f32.mrf.mxu0
        %v1194 = vadd.f32 %v852, %v1193
        %v1195 = vpop.f32.mrf.mxu0
        %1196 = vmatprep.mubr.bf16.mxu0 %v901
        %1197 = vmatmul.mubr.bf16.gmra.mxu0 %v900
        %v1198 = vpop.f32.mrf.mxu0
        %v1199 = vadd.f32 %v857, %v1198
        %v1200 = vpop.f32.mrf.mxu0
        %v1201 = vpop.f32.mrf.mxu0
        %v1202 = vadd.f32 %v860, %v1201
        %v1203 = vpop.f32.mrf.mxu0
        %1204 = vmatprep.mubr.bf16.mxu0 %v905
        %1205 = vmatmul.mubr.bf16.gmra.mxu0 %v904
        %v1206 = vpop.f32.mrf.mxu0
        %v1207 = vadd.f32 %v865, %v1206
        %v1208 = vpop.f32.mrf.mxu0
        %v1209 = vpop.f32.mrf.mxu0
        %v1210 = vadd.f32 %v868, %v1209
        %v1211 = vpop.f32.mrf.mxu0
        %1212 = vmatprep.mubr.bf16.mxu0 %v909
        %1213 = vmatmul.mubr.bf16.gmra.mxu0 %v908
        %v1214 = vpop.f32.mrf.mxu0
        %v1215 = vadd.f32 %v873, %v1214
        %v1216 = vpop.f32.mrf.mxu0
        %v1217 = vpop.f32.mrf.mxu0
        %v1218 = vpop.f32.mrf.mxu0
        %1219 = vdwg.mxu0
        %1220 = vmatprep.subr.bf16.mxu0 0
        %1221 = vmatpush1.bf16.msra.mxu0 %v1091
        %1222 = vmatprep.subr.bf16.mxu0 0
        %1223 = vmatpush1.bf16.msra.mxu0 %v1090
        %1224 = vmatprep.subr.bf16.mxu0 0
        %1225 = vmatpush1.bf16.msra.mxu0 %v1089
        %1226 = vmatprep.subr.bf16.mxu0 0
        %1227 = vmatpush1.bf16.msra.mxu0 %v1088
        %1228 = vmatprep.subr.bf16.mxu0 0
        %1229 = vmatpush1.bf16.msra.mxu0 %v1087
        %1230 = vmatprep.subr.bf16.mxu0 0
        %1231 = vmatpush1.bf16.msra.mxu0 %v1086
        %1232 = vmatprep.subr.bf16.mxu0 0
        %1233 = vmatpush1.bf16.msra.mxu0 %v1085
        %1234 = vmatprep.subr.bf16.mxu0 0
        %1235 = vmatpush1.bf16.msra.mxu0 %v1084
        %1236 = vmatprep.subr.bf16.mxu0 0
        %1237 = vmatpush2.bf16.msra.mxu0 %v1099
        %1238 = vmatprep.subr.bf16.mxu0 0
        %1239 = vmatpush2.bf16.msra.mxu0 %v1098
        %1240 = vmatprep.subr.bf16.mxu0 0
        %1241 = vmatpush2.bf16.msra.mxu0 %v1097
        %1242 = vmatprep.subr.bf16.mxu0 0
        %1243 = vmatpush2.bf16.msra.mxu0 %v1096
        %1244 = vmatprep.subr.bf16.mxu0 0
        %1245 = vmatpush2.bf16.msra.mxu0 %v1095
        %1246 = vmatprep.subr.bf16.mxu0 0
        %1247 = vmatpush2.bf16.msra.mxu0 %v1094
        %1248 = vmatprep.subr.bf16.mxu0 0
        %1249 = vmatpush2.bf16.msra.mxu0 %v1093
        %1250 = vmatprep.subr.bf16.mxu0 0
        %1251 = vmatpush2.bf16.msra.mxu0 %v1092
        %1252 = vmatprep.mubr.bf16.mxu0 %v887
        %1253 = vmatmul.mubr.bf16.gmra.mxu0 %v886
        %v1254 = vpop.f32.mrf.mxu0
        %v1255 = vadd.f32 %v1167, %v1254
        %v1256 = vpop.f32.mrf.mxu0
        %v1257 = vpop.f32.mrf.mxu0
        %v1258 = vadd.f32 %v1170, %v1257
        %v1259 = vpop.f32.mrf.mxu0
        %1260 = vmatprep.mubr.bf16.mxu0 %v891
        %1261 = vmatmul.mubr.bf16.gmra.mxu0 %v890
        %v1262 = vpop.f32.mrf.mxu0
        %v1263 = vadd.f32 %v1175, %v1262
        %v1264 = vpop.f32.mrf.mxu0
        %v1265 = vpop.f32.mrf.mxu0
        %v1266 = vadd.f32 %v1178, %v1265
        %v1267 = vpop.f32.mrf.mxu0
        %1268 = vmatprep.mubr.bf16.mxu0 %v895
        %1269 = vmatmul.mubr.bf16.gmra.mxu0 %v894
        %v1270 = vpop.f32.mrf.mxu0
        %v1271 = vadd.f32 %v1183, %v1270
        %v1272 = vpop.f32.mrf.mxu0
        %v1273 = vpop.f32.mrf.mxu0
        %v1274 = vadd.f32 %v1186, %v1273
        %v1275 = vpop.f32.mrf.mxu0
        %1276 = vmatprep.mubr.bf16.mxu0 %v899
        %1277 = vmatmul.mubr.bf16.gmra.mxu0 %v898
        %v1278 = vpop.f32.mrf.mxu0
        %v1279 = vadd.f32 %v1191, %v1278
        %v1280 = vpop.f32.mrf.mxu0
        %v1281 = vpop.f32.mrf.mxu0
        %v1282 = vadd.f32 %v1194, %v1281
        %v1283 = vpop.f32.mrf.mxu0
        %1284 = vmatprep.mubr.bf16.mxu0 %v903
        %1285 = vmatmul.mubr.bf16.gmra.mxu0 %v902
        %v1286 = vpop.f32.mrf.mxu0
        %v1287 = vadd.f32 %v1199, %v1286
        %v1288 = vpop.f32.mrf.mxu0
        %v1289 = vpop.f32.mrf.mxu0
        %v1290 = vadd.f32 %v1202, %v1289
        %v1291 = vpop.f32.mrf.mxu0
        %1292 = vmatprep.mubr.bf16.mxu0 %v907
        %1293 = vmatmul.mubr.bf16.gmra.mxu0 %v906
        %v1294 = vpop.f32.mrf.mxu0
        %v1295 = vadd.f32 %v1207, %v1294
        %v1296 = vpop.f32.mrf.mxu0
        %v1297 = vpop.f32.mrf.mxu0
        %v1298 = vadd.f32 %v1210, %v1297
        %v1299 = vpop.f32.mrf.mxu0
        %1300 = vmatprep.mubr.bf16.mxu0 %v911
        %1301 = vmatmul.mubr.bf16.gmra.mxu0 %v910
        %v1302 = vpop.f32.mrf.mxu0
        %v1303 = vadd.f32 %v1215, %v1302
        %v1304 = vpop.f32.mrf.mxu0
        %v1305 = vpop.f32.mrf.mxu0
        %v1306 = vpop.f32.mrf.mxu0
        %1307 = vdwg.mxu0
        %v1308 = vld [vmem:[%s218 + $0x20] sm:$0xff]
        %v1309 = vld [vmem:[%s218 + $0x28] sm:$0xff]
        %v1310 = vld [vmem:[%s218 + $0x30] sm:$0xff]
        %v1311 = vld [vmem:[%s218 + $0x38] sm:$0xff]
        %v1312 = vld [vmem:[%s218 + $0x40] sm:$0xff]
        %v1313 = vld [vmem:[%s218 + $0x48] sm:$0xff]
        %v1314 = vld [vmem:[%s218 + $0x50] sm:$0xff]
        %v1315 = vld [vmem:[%s218 + $0x58] sm:$0xff]
        %v1316 = vld [vmem:[%s218 + $0x60] sm:$0xff]
        %v1317 = vld [vmem:[%s218 + $0x68] sm:$0xff]
        %v1318 = vld [vmem:[%s218 + $0x70] sm:$0xff]
        %v1319 = vld [vmem:[%s218 + $0x78] sm:$0xff]
        %v1320 = vld [vmem:[%s218 + $0x80] sm:$0xff]
        %v1321 = vld [vmem:[%s218 + $0x88] sm:$0xff]
        %v1322 = vld [vmem:[%s218 + $0x90] sm:$0xff]
        %v1323 = vld [vmem:[%s218 + $0x98] sm:$0xff]
        %v1324 = vld [vmem:[%s218 + $0xa0] sm:$0xff]
        %v1325 = vld [vmem:[%s218 + $0xa8] sm:$0xff]
        %v1326 = vld [vmem:[%s218 + $0xb0] sm:$0xff]
        %v1327 = vld [vmem:[%s218 + $0xb8] sm:$0xff]
        %v1328 = vld [vmem:[%s218 + $0xc0] sm:$0xff]
        %v1329 = vld [vmem:[%s218 + $0xc8] sm:$0xff]
        %v1330 = vld [vmem:[%s218 + $0xd0] sm:$0xff]
        %v1331 = vld [vmem:[%s218 + $0xd8] sm:$0xff]
        %v1332 = vld [vmem:[%s218 + $0xe0] sm:$0xff]
        %v1333 = vld [vmem:[%s218 + $0xe8] sm:$0xff]
        %s1334 = scalar_lea.vmem %s1, 512
        %v1335 = vld [vmem:[%s1334] sm:$0xf]
        %v1336 = vld [vmem:[%s1334 + $0x4] sm:$0xf]
        %v1337 = vld [vmem:[%s1334 + $0x8] sm:$0xf]
        %v1338 = vld [vmem:[%s1334 + $0xc] sm:$0xf]
        %v1339 = vld [vmem:[%s1334 + $0x10] sm:$0xf]
        %v1340 = vld [vmem:[%s1334 + $0x14] sm:$0xf]
        %v1341 = vld [vmem:[%s1334 + $0x18] sm:$0xf]
        %v1342 = vld [vmem:[%s1334 + $0x1c] sm:$0xf]
        %v1343 = vld [vmem:[%s1334 + $0x20] sm:$0xf]
        %v1344 = vld [vmem:[%s1334 + $0x24] sm:$0xf]
        %v1345 = vld [vmem:[%s1334 + $0x28] sm:$0xf]
        %v1346 = vld [vmem:[%s1334 + $0x2c] sm:$0xf]
        %v1347 = vld [vmem:[%s1334 + $0x30] sm:$0xf]
        %v1348 = vld [vmem:[%s1334 + $0x34] sm:$0xf]
        %v1349 = vld [vmem:[%s1334 + $0x38] sm:$0xf]
        %v1350 = vld [vmem:[%s1334 + $0x3c] sm:$0xf]
        %v1351 = vld [vmem:[%s1334 + $0x40] sm:$0xf]
        %v1352 = vld [vmem:[%s1334 + $0x44] sm:$0xf]
        %v1353 = vld [vmem:[%s1334 + $0x48] sm:$0xf]
        %v1354 = vld [vmem:[%s1334 + $0x4c] sm:$0xf]
        %v1355 = vld [vmem:[%s1334 + $0x50] sm:$0xf]
        %v1356 = vld [vmem:[%s1334 + $0x54] sm:$0xf]
        %v1357 = vld [vmem:[%s1334 + $0x58] sm:$0xf]
        %v1358 = vld [vmem:[%s1334 + $0x5c] sm:$0xf]
        %v1359 = vld [vmem:[%s1334 + $0x60] sm:$0xf]
        %v1360 = vld [vmem:[%s1334 + $0x64] sm:$0xf]
        %v1361 = vld [vmem:[%s1334 + $0x68] sm:$0xf]
        %v1362 = vld [vmem:[%s1334 + $0x6c] sm:$0xf]
        %v1363 = vld [vmem:[%s1334 + $0x70] sm:$0xf]
        %v1364 = vld [vmem:[%s1334 + $0x74] sm:$0xf]
        %v1365 = vld [vmem:[%s1334 + $0x78] sm:$0xf]
        %v1366 = vld [vmem:[%s1334 + $0x7c] sm:$0xf]
        %v1367 = vld [vmem:[%s1334 + $0x80] sm:$0xf]
        %v1368 = vld [vmem:[%s1334 + $0x84] sm:$0xf]
        %v1369 = vld [vmem:[%s1334 + $0x88] sm:$0xf]
        %v1370 = vld [vmem:[%s1334 + $0x8c] sm:$0xf]
        %v1371 = vld [vmem:[%s1334 + $0x90] sm:$0xf]
        %v1372 = vld [vmem:[%s1334 + $0x94] sm:$0xf]
        %v1373 = vld [vmem:[%s1334 + $0x98] sm:$0xf]
        %v1374 = vld [vmem:[%s1334 + $0x9c] sm:$0xf]
        %v1375 = vld [vmem:[%s1334 + $0xa0] sm:$0xf]
        %v1376 = vld [vmem:[%s1334 + $0xa4] sm:$0xf]
        %v1377 = vld [vmem:[%s1334 + $0xa8] sm:$0xf]
        %v1378 = vld [vmem:[%s1334 + $0xac] sm:$0xf]
        %v1379 = vld [vmem:[%s1334 + $0xb0] sm:$0xf]
        %v1380 = vld [vmem:[%s1334 + $0xb4] sm:$0xf]
        %v1381 = vld [vmem:[%s1334 + $0xb8] sm:$0xf]
        %v1382 = vld [vmem:[%s1334 + $0xbc] sm:$0xf]
        %v1383 = vld [vmem:[%s1334 + $0xc0] sm:$0xf]
        %v1384 = vld [vmem:[%s1334 + $0xc4] sm:$0xf]
        %v1385 = vld [vmem:[%s1334 + $0xc8] sm:$0xf]
        %v1386 = vld [vmem:[%s1334 + $0xcc] sm:$0xf]
        %v1387 = vld [vmem:[%s1334 + $0xd0] sm:$0xf]
        %v1388 = vld [vmem:[%s1334 + $0xd4] sm:$0xf]
        %v1389 = vld [vmem:[%s1334 + $0xd8] sm:$0xf]
        %v1390 = vld [vmem:[%s1334 + $0xdc] sm:$0xf]
        %v1391 = vld [vmem:[%s1334 + $0xe0] sm:$0xf]
        %v1392 = vld [vmem:[%s1334 + $0xe4] sm:$0xf]
        %v1393 = vld [vmem:[%s1334 + $0xe8] sm:$0xf]
        %v1394 = vld [vmem:[%s1334 + $0xec] sm:$0xf]
        %v1395 = vld [vmem:[%s1334 + $0xf0] sm:$0xf]
        %v1396 = vld [vmem:[%s1334 + $0xf4] sm:$0xf]
        %v1397 = vld [vmem:[%s1334 + $0xf8] sm:$0xf]
        %v1398 = vld [vmem:[%s1334 + $0xfc] sm:$0xf]
        %v1425 = vunpack.c.l.b16 %v1308
        %v1426 = vunpack.c.h.b16 %v1308
        %v1427 = vunpack.c.l.b16 %v1309
        %v1428 = vunpack.c.h.b16 %v1309
        %v1429 = vunpack.c.l.b16 %v1310
        %v1430 = vunpack.c.h.b16 %v1310
        %v1431 = vunpack.c.l.b16 %v1311
        %v1432 = vunpack.c.h.b16 %v1311
        %v1433 = vunpack.c.l.b16 %v1312
        %v1434 = vunpack.c.h.b16 %v1312
        %v1435 = vunpack.c.l.b16 %v1313
        %v1436 = vunpack.c.h.b16 %v1313
        %v1437 = vunpack.c.l.b16 %v1314
        %v1438 = vunpack.c.h.b16 %v1314
        %v1439 = vunpack.c.l.b16 %v1315
        %v1440 = vunpack.c.h.b16 %v1315
        %v1441 = vunpack.c.l.b16 %v1316
        %v1442 = vunpack.c.h.b16 %v1316
        %v1443 = vunpack.c.l.b16 %v1317
        %v1444 = vunpack.c.h.b16 %v1317
        %v1445 = vunpack.c.l.b16 %v1318
        %v1446 = vunpack.c.h.b16 %v1318
        %v1447 = vunpack.c.l.b16 %v1319
        %v1448 = vunpack.c.h.b16 %v1319
        %v1449 = vunpack.c.l.b16 %v1320
        %v1450 = vunpack.c.h.b16 %v1320
        %v1451 = vunpack.c.l.b16 %v1321
        %v1452 = vunpack.c.h.b16 %v1321
        %v1453 = vunpack.c.l.b16 %v1322
        %v1454 = vunpack.c.h.b16 %v1322
        %v1455 = vunpack.c.l.b16 %v1323
        %v1456 = vunpack.c.h.b16 %v1323
        %v1457 = vunpack.c.l.b16 %v1324
        %v1458 = vunpack.c.h.b16 %v1324
        %v1459 = vunpack.c.l.b16 %v1325
        %v1460 = vunpack.c.h.b16 %v1325
        %v1461 = vunpack.c.l.b16 %v1326
        %v1462 = vunpack.c.h.b16 %v1326
        %v1463 = vunpack.c.l.b16 %v1327
        %v1464 = vunpack.c.h.b16 %v1327
        %v1465 = vunpack.c.l.b16 %v1328
        %v1466 = vunpack.c.h.b16 %v1328
        %v1467 = vunpack.c.l.b16 %v1329
        %v1468 = vunpack.c.h.b16 %v1329
        %v1469 = vunpack.c.l.b16 %v1330
        %v1470 = vunpack.c.h.b16 %v1330
        %v1471 = vunpack.c.l.b16 %v1331
        %v1472 = vunpack.c.h.b16 %v1331
        %v1473 = vunpack.c.l.b16 %v1332
        %v1474 = vunpack.c.h.b16 %v1332
        %v1475 = vunpack.c.l.b16 %v1333
        %v1476 = vunpack.c.h.b16 %v1333
        %v1477 = vpack.c.b16 %v1429, %v1425
        %v1478 = vpack.c.b16 %v1430, %v1426
        %v1479 = vpack.c.b16 %v1431, %v1427
        %v1480 = vpack.c.b16 %v1432, %v1428
        %v1481 = vpack.c.b16 %v1437, %v1433
        %v1482 = vpack.c.b16 %v1438, %v1434
        %v1483 = vpack.c.b16 %v1439, %v1435
        %v1484 = vpack.c.b16 %v1440, %v1436
        %v1485 = vpack.c.b16 %v1445, %v1441
        %v1486 = vpack.c.b16 %v1446, %v1442
        %v1487 = vpack.c.b16 %v1447, %v1443
        %v1488 = vpack.c.b16 %v1448, %v1444
        %v1489 = vpack.c.b16 %v1453, %v1449
        %v1490 = vpack.c.b16 %v1454, %v1450
        %v1491 = vpack.c.b16 %v1455, %v1451
        %v1492 = vpack.c.b16 %v1456, %v1452
        %v1493 = vpack.c.b16 %v1461, %v1457
        %v1494 = vpack.c.b16 %v1462, %v1458
        %v1495 = vpack.c.b16 %v1463, %v1459
        %v1496 = vpack.c.b16 %v1464, %v1460
        %v1497 = vpack.c.b16 %v1469, %v1465
        %v1498 = vpack.c.b16 %v1470, %v1466
        %v1499 = vpack.c.b16 %v1471, %v1467
        %v1500 = vpack.c.b16 %v1472, %v1468
        %v1501 = vpack.c.b16 %v1473, %v1473
        %v1502 = vpack.c.b16 %v1474, %v1474
        %v1503 = vpack.c.b16 %v1475, %v1475
        %v1504 = vpack.c.b16 %v1476, %v1476
        %v1597 = vunpack.c.l.b16 %v1335
        %v1598 = vunpack.c.l.b16 %v1336
        %v1599 = vunpack.c.l.b16 %v1337
        %v1600 = vunpack.c.l.b16 %v1338
        %v1601 = vunpack.c.l.b16 %v1339
        %v1602 = vunpack.c.l.b16 %v1340
        %v1603 = vunpack.c.l.b16 %v1341
        %v1604 = vunpack.c.l.b16 %v1342
        %v1605 = vunpack.c.l.b16 %v1343
        %v1606 = vunpack.c.l.b16 %v1344
        %v1607 = vunpack.c.l.b16 %v1345
        %v1608 = vunpack.c.l.b16 %v1346
        %v1609 = vunpack.c.l.b16 %v1347
        %v1610 = vunpack.c.l.b16 %v1348
        %v1611 = vunpack.c.l.b16 %v1349
        %v1612 = vunpack.c.l.b16 %v1350
        %v1613 = vunpack.c.l.b16 %v1351
        %v1614 = vunpack.c.l.b16 %v1352
        %v1615 = vunpack.c.l.b16 %v1353
        %v1616 = vunpack.c.l.b16 %v1354
        %v1617 = vunpack.c.l.b16 %v1355
        %v1618 = vunpack.c.l.b16 %v1356
        %v1619 = vunpack.c.l.b16 %v1357
        %v1620 = vunpack.c.l.b16 %v1358
        %v1621 = vunpack.c.l.b16 %v1359
        %v1622 = vunpack.c.l.b16 %v1360
        %v1623 = vunpack.c.l.b16 %v1361
        %v1624 = vunpack.c.l.b16 %v1362
        %v1625 = vunpack.c.l.b16 %v1363
        %v1626 = vunpack.c.l.b16 %v1364
        %v1627 = vunpack.c.l.b16 %v1365
        %v1628 = vunpack.c.l.b16 %v1366
        %v1629 = vunpack.c.l.b16 %v1367
        %v1630 = vunpack.c.l.b16 %v1368
        %v1631 = vunpack.c.l.b16 %v1369
        %v1632 = vunpack.c.l.b16 %v1370
        %v1633 = vunpack.c.l.b16 %v1371
        %v1634 = vunpack.c.l.b16 %v1372
        %v1635 = vunpack.c.l.b16 %v1373
        %v1636 = vunpack.c.l.b16 %v1374
        %v1637 = vunpack.c.l.b16 %v1375
        %v1638 = vunpack.c.l.b16 %v1376
        %v1639 = vunpack.c.l.b16 %v1377
        %v1640 = vunpack.c.l.b16 %v1378
        %v1641 = vunpack.c.l.b16 %v1379
        %v1642 = vunpack.c.l.b16 %v1380
        %v1643 = vunpack.c.l.b16 %v1381
        %v1644 = vunpack.c.l.b16 %v1382
        %v1645 = vunpack.c.l.b16 %v1383
        %v1646 = vunpack.c.l.b16 %v1384
        %v1647 = vunpack.c.l.b16 %v1385
        %v1648 = vunpack.c.l.b16 %v1386
        %v1649 = vunpack.c.l.b16 %v1387
        %v1650 = vunpack.c.l.b16 %v1388
        %v1651 = vunpack.c.l.b16 %v1389
        %v1652 = vunpack.c.l.b16 %v1390
        %v1653 = vunpack.c.l.b16 %v1391
        %v1654 = vunpack.c.l.b16 %v1392
        %v1655 = vunpack.c.l.b16 %v1393
        %v1656 = vunpack.c.l.b16 %v1394
        %v1657 = vunpack.c.l.b16 %v1395
        %v1658 = vunpack.c.l.b16 %v1396
        %v1659 = vunpack.c.l.b16 %v1397
        %v1660 = vunpack.c.l.b16 %v1398
        %v1661 = vpack.c.b16 %v1598, %v1597
        %v1662 = vpack.c.b16 %v1600, %v1599
        %v1663 = vpack.c.b16 %v1602, %v1601
        %v1664 = vpack.c.b16 %v1604, %v1603
        %v1665 = vpack.c.b16 %v1606, %v1605
        %v1666 = vpack.c.b16 %v1608, %v1607
        %v1667 = vpack.c.b16 %v1610, %v1609
        %v1668 = vpack.c.b16 %v1612, %v1611
        %v1669 = vpack.c.b16 %v1614, %v1613
        %v1670 = vpack.c.b16 %v1616, %v1615
        %v1671 = vpack.c.b16 %v1618, %v1617
        %v1672 = vpack.c.b16 %v1620, %v1619
        %v1673 = vpack.c.b16 %v1622, %v1621
        %v1674 = vpack.c.b16 %v1624, %v1623
        %v1675 = vpack.c.b16 %v1626, %v1625
        %v1676 = vpack.c.b16 %v1628, %v1627
        %v1677 = vpack.c.b16 %v1630, %v1629
        %v1678 = vpack.c.b16 %v1632, %v1631
        %v1679 = vpack.c.b16 %v1634, %v1633
        %v1680 = vpack.c.b16 %v1636, %v1635
        %v1681 = vpack.c.b16 %v1638, %v1637
        %v1682 = vpack.c.b16 %v1640, %v1639
        %v1683 = vpack.c.b16 %v1642, %v1641
        %v1684 = vpack.c.b16 %v1644, %v1643
        %v1685 = vpack.c.b16 %v1646, %v1645
        %v1686 = vpack.c.b16 %v1648, %v1647
        %v1687 = vpack.c.b16 %v1650, %v1649
        %v1688 = vpack.c.b16 %v1652, %v1651
        %v1689 = vpack.c.b16 %v1654, %v1653
        %v1690 = vpack.c.b16 %v1656, %v1655
        %v1691 = vpack.c.b16 %v1658, %v1657
        %v1692 = vpack.c.b16 %v1660, %v1659
        %1725 = vmatprep.subr.bf16.mxu0 0
        %1726 = vmatpush1.bf16.msra.mxu0 %v1668
        %1727 = vmatprep.subr.bf16.mxu0 0
        %1728 = vmatpush1.bf16.msra.mxu0 %v1667
        %1729 = vmatprep.subr.bf16.mxu0 0
        %1730 = vmatpush1.bf16.msra.mxu0 %v1666
        %1731 = vmatprep.subr.bf16.mxu0 0
        %1732 = vmatpush1.bf16.msra.mxu0 %v1665
        %1733 = vmatprep.subr.bf16.mxu0 0
        %1734 = vmatpush1.bf16.msra.mxu0 %v1664
        %1735 = vmatprep.subr.bf16.mxu0 0
        %1736 = vmatpush1.bf16.msra.mxu0 %v1663
        %1737 = vmatprep.subr.bf16.mxu0 0
        %1738 = vmatpush1.bf16.msra.mxu0 %v1662
        %1739 = vmatprep.subr.bf16.mxu0 0
        %1740 = vmatpush1.bf16.msra.mxu0 %v1661
        %1741 = vmatprep.subr.bf16.mxu0 0
        %1742 = vmatpush2.bf16.msra.mxu0 %v1676
        %1743 = vmatprep.subr.bf16.mxu0 0
        %1744 = vmatpush2.bf16.msra.mxu0 %v1675
        %1745 = vmatprep.subr.bf16.mxu0 0
        %1746 = vmatpush2.bf16.msra.mxu0 %v1674
        %1747 = vmatprep.subr.bf16.mxu0 0
        %1748 = vmatpush2.bf16.msra.mxu0 %v1673
        %1749 = vmatprep.subr.bf16.mxu0 0
        %1750 = vmatpush2.bf16.msra.mxu0 %v1672
        %1751 = vmatprep.subr.bf16.mxu0 0
        %1752 = vmatpush2.bf16.msra.mxu0 %v1671
        %1753 = vmatprep.subr.bf16.mxu0 0
        %1754 = vmatpush2.bf16.msra.mxu0 %v1670
        %1755 = vmatprep.subr.bf16.mxu0 0
        %1756 = vmatpush2.bf16.msra.mxu0 %v1669
        %1757 = vmatprep.mubr.bf16.mxu0 %v1478
        %1758 = vmatmul.mubr.bf16.gmra.mxu0 %v1477
        %v1759 = vpop.f32.mrf.mxu0
        %v1760 = vadd.f32 0.0, %v1759
        %v1761 = vpop.f32.mrf.mxu0
        %v1762 = vpop.f32.mrf.mxu0
        %v1763 = vadd.f32 0.0, %v1762
        %v1764 = vpop.f32.mrf.mxu0
        %1765 = vmatprep.mubr.bf16.mxu0 %v1482
        %1766 = vmatmul.mubr.bf16.gmra.mxu0 %v1481
        %v1767 = vpop.f32.mrf.mxu0
        %v1768 = vadd.f32 0.0, %v1767
        %v1769 = vpop.f32.mrf.mxu0
        %v1770 = vpop.f32.mrf.mxu0
        %v1771 = vadd.f32 0.0, %v1770
        %v1772 = vpop.f32.mrf.mxu0
        %1773 = vmatprep.mubr.bf16.mxu0 %v1486
        %1774 = vmatmul.mubr.bf16.gmra.mxu0 %v1485
        %v1775 = vpop.f32.mrf.mxu0
        %v1776 = vadd.f32 0.0, %v1775
        %v1777 = vpop.f32.mrf.mxu0
        %v1778 = vpop.f32.mrf.mxu0
        %v1779 = vadd.f32 0.0, %v1778
        %v1780 = vpop.f32.mrf.mxu0
        %1781 = vmatprep.mubr.bf16.mxu0 %v1490
        %1782 = vmatmul.mubr.bf16.gmra.mxu0 %v1489
        %v1783 = vpop.f32.mrf.mxu0
        %v1784 = vadd.f32 0.0, %v1783
        %v1785 = vpop.f32.mrf.mxu0
        %v1786 = vpop.f32.mrf.mxu0
        %v1787 = vadd.f32 0.0, %v1786
        %v1788 = vpop.f32.mrf.mxu0
        %1789 = vmatprep.mubr.bf16.mxu0 %v1494
        %1790 = vmatmul.mubr.bf16.gmra.mxu0 %v1493
        %v1791 = vpop.f32.mrf.mxu0
        %v1792 = vadd.f32 0.0, %v1791
        %v1793 = vpop.f32.mrf.mxu0
        %v1794 = vpop.f32.mrf.mxu0
        %v1795 = vadd.f32 0.0, %v1794
        %v1796 = vpop.f32.mrf.mxu0
        %1797 = vmatprep.mubr.bf16.mxu0 %v1498
        %1798 = vmatmul.mubr.bf16.gmra.mxu0 %v1497
        %v1799 = vpop.f32.mrf.mxu0
        %v1800 = vadd.f32 0.0, %v1799
        %v1801 = vpop.f32.mrf.mxu0
        %v1802 = vpop.f32.mrf.mxu0
        %v1803 = vadd.f32 0.0, %v1802
        %v1804 = vpop.f32.mrf.mxu0
        %1805 = vmatprep.mubr.bf16.mxu0 %v1502
        %1806 = vmatmul.mubr.bf16.gmra.mxu0 %v1501
        %v1807 = vpop.f32.mrf.mxu0
        %v1808 = vadd.f32 0.0, %v1807
        %v1809 = vpop.f32.mrf.mxu0
        %v1810 = vpop.f32.mrf.mxu0
        %v1811 = vpop.f32.mrf.mxu0
        %1812 = vdwg.mxu0
        %1813 = vmatprep.subr.bf16.mxu0 0
        %1814 = vmatpush1.bf16.msra.mxu0 %v1684
        %1815 = vmatprep.subr.bf16.mxu0 0
        %1816 = vmatpush1.bf16.msra.mxu0 %v1683
        %1817 = vmatprep.subr.bf16.mxu0 0
        %1818 = vmatpush1.bf16.msra.mxu0 %v1682
        %1819 = vmatprep.subr.bf16.mxu0 0
        %1820 = vmatpush1.bf16.msra.mxu0 %v1681
        %1821 = vmatprep.subr.bf16.mxu0 0
        %1822 = vmatpush1.bf16.msra.mxu0 %v1680
        %1823 = vmatprep.subr.bf16.mxu0 0
        %1824 = vmatpush1.bf16.msra.mxu0 %v1679
        %1825 = vmatprep.subr.bf16.mxu0 0
        %1826 = vmatpush1.bf16.msra.mxu0 %v1678
        %1827 = vmatprep.subr.bf16.mxu0 0
        %1828 = vmatpush1.bf16.msra.mxu0 %v1677
        %1829 = vmatprep.subr.bf16.mxu0 0
        %1830 = vmatpush2.bf16.msra.mxu0 %v1692
        %1831 = vmatprep.subr.bf16.mxu0 0
        %1832 = vmatpush2.bf16.msra.mxu0 %v1691
        %1833 = vmatprep.subr.bf16.mxu0 0
        %1834 = vmatpush2.bf16.msra.mxu0 %v1690
        %1835 = vmatprep.subr.bf16.mxu0 0
        %1836 = vmatpush2.bf16.msra.mxu0 %v1689
        %1837 = vmatprep.subr.bf16.mxu0 0
        %1838 = vmatpush2.bf16.msra.mxu0 %v1688
        %1839 = vmatprep.subr.bf16.mxu0 0
        %1840 = vmatpush2.bf16.msra.mxu0 %v1687
        %1841 = vmatprep.subr.bf16.mxu0 0
        %1842 = vmatpush2.bf16.msra.mxu0 %v1686
        %1843 = vmatprep.subr.bf16.mxu0 0
        %1844 = vmatpush2.bf16.msra.mxu0 %v1685
        %1845 = vmatprep.mubr.bf16.mxu0 %v1480
        %1846 = vmatmul.mubr.bf16.gmra.mxu0 %v1479
        %v1847 = vpop.f32.mrf.mxu0
        %v1848 = vadd.f32 %v1760, %v1847
        %v1849 = vpop.f32.mrf.mxu0
        %v1850 = vpop.f32.mrf.mxu0
        %v1851 = vadd.f32 %v1763, %v1850
        %v1852 = vpop.f32.mrf.mxu0
        %1853 = vmatprep.mubr.bf16.mxu0 %v1484
        %1854 = vmatmul.mubr.bf16.gmra.mxu0 %v1483
        %v1855 = vpop.f32.mrf.mxu0
        %v1856 = vadd.f32 %v1768, %v1855
        %v1857 = vpop.f32.mrf.mxu0
        %v1858 = vpop.f32.mrf.mxu0
        %v1859 = vadd.f32 %v1771, %v1858
        %v1860 = vpop.f32.mrf.mxu0
        %1861 = vmatprep.mubr.bf16.mxu0 %v1488
        %1862 = vmatmul.mubr.bf16.gmra.mxu0 %v1487
        %v1863 = vpop.f32.mrf.mxu0
        %v1864 = vadd.f32 %v1776, %v1863
        %v1865 = vpop.f32.mrf.mxu0
        %v1866 = vpop.f32.mrf.mxu0
        %v1867 = vadd.f32 %v1779, %v1866
        %v1868 = vpop.f32.mrf.mxu0
        %1869 = vmatprep.mubr.bf16.mxu0 %v1492
        %1870 = vmatmul.mubr.bf16.gmra.mxu0 %v1491
        %v1871 = vpop.f32.mrf.mxu0
        %v1872 = vadd.f32 %v1784, %v1871
        %v1873 = vpop.f32.mrf.mxu0
        %v1874 = vpop.f32.mrf.mxu0
        %v1875 = vadd.f32 %v1787, %v1874
        %v1876 = vpop.f32.mrf.mxu0
        %1877 = vmatprep.mubr.bf16.mxu0 %v1496
        %1878 = vmatmul.mubr.bf16.gmra.mxu0 %v1495
        %v1879 = vpop.f32.mrf.mxu0
        %v1880 = vadd.f32 %v1792, %v1879
        %v1881 = vpop.f32.mrf.mxu0
        %v1882 = vpop.f32.mrf.mxu0
        %v1883 = vadd.f32 %v1795, %v1882
        %v1884 = vpop.f32.mrf.mxu0
        %1885 = vmatprep.mubr.bf16.mxu0 %v1500
        %1886 = vmatmul.mubr.bf16.gmra.mxu0 %v1499
        %v1887 = vpop.f32.mrf.mxu0
        %v1888 = vadd.f32 %v1800, %v1887
        %v1889 = vpop.f32.mrf.mxu0
        %v1890 = vpop.f32.mrf.mxu0
        %v1891 = vadd.f32 %v1803, %v1890
        %v1892 = vpop.f32.mrf.mxu0
        %1893 = vmatprep.mubr.bf16.mxu0 %v1504
        %1894 = vmatmul.mubr.bf16.gmra.mxu0 %v1503
        %v1895 = vpop.f32.mrf.mxu0
        %v1896 = vadd.f32 %v1808, %v1895
        %v1897 = vpop.f32.mrf.mxu0
        %v1898 = vpop.f32.mrf.mxu0
        %v1899 = vpop.f32.mrf.mxu0
        %1900 = vdwg.mxu0
        %v1901 = vadd.f32 %v1255, %v1848
        %v1902 = vadd.f32 %v1258, %v1851
        %v1903 = vadd.f32 %v1263, %v1856
        %v1904 = vadd.f32 %v1266, %v1859
        %v1905 = vadd.f32 %v1271, %v1864
        %v1906 = vadd.f32 %v1274, %v1867
        %v1907 = vadd.f32 %v1279, %v1872
        %v1908 = vadd.f32 %v1282, %v1875
        %v1909 = vadd.f32 %v1287, %v1880
        %v1910 = vadd.f32 %v1290, %v1883
        %v1911 = vadd.f32 %v1295, %v1888
        %v1912 = vadd.f32 %v1298, %v1891
        %v1913 = vadd.f32 %v1303, %v1896
        %v1914 = vld [vmem:[%s218 + $0x30] sm:$0xff]
        %v1915 = vld [vmem:[%s218 + $0x38] sm:$0xff]
        %v1916 = vld [vmem:[%s218 + $0x40] sm:$0xff]
        %v1917 = vld [vmem:[%s218 + $0x48] sm:$0xff]
        %v1918 = vld [vmem:[%s218 + $0x50] sm:$0xff]
        %v1919 = vld [vmem:[%s218 + $0x58] sm:$0xff]
        %v1920 = vld [vmem:[%s218 + $0x60] sm:$0xff]
        %v1921 = vld [vmem:[%s218 + $0x68] sm:$0xff]
        %v1922 = vld [vmem:[%s218 + $0x70] sm:$0xff]
        %v1923 = vld [vmem:[%s218 + $0x78] sm:$0xff]
        %v1924 = vld [vmem:[%s218 + $0x80] sm:$0xff]
        %v1925 = vld [vmem:[%s218 + $0x88] sm:$0xff]
        %v1926 = vld [vmem:[%s218 + $0x90] sm:$0xff]
        %v1927 = vld [vmem:[%s218 + $0x98] sm:$0xff]
        %v1928 = vld [vmem:[%s218 + $0xa0] sm:$0xff]
        %v1929 = vld [vmem:[%s218 + $0xa8] sm:$0xff]
        %v1930 = vld [vmem:[%s218 + $0xb0] sm:$0xff]
        %v1931 = vld [vmem:[%s218 + $0xb8] sm:$0xff]
        %v1932 = vld [vmem:[%s218 + $0xc0] sm:$0xff]
        %v1933 = vld [vmem:[%s218 + $0xc8] sm:$0xff]
        %v1934 = vld [vmem:[%s218 + $0xd0] sm:$0xff]
        %v1935 = vld [vmem:[%s218 + $0xd8] sm:$0xff]
        %v1936 = vld [vmem:[%s218 + $0xe0] sm:$0xff]
        %v1937 = vld [vmem:[%s218 + $0xe8] sm:$0xff]
        %v1938 = vld [vmem:[%s218 + $0xf0] sm:$0xff]
        %v1939 = vld [vmem:[%s218 + $0xf8] sm:$0xff]
        %s1940 = scalar_lea.vmem %s1, 768
        %v1941 = vld [vmem:[%s1940] sm:$0xf]
        %v1942 = vld [vmem:[%s1940 + $0x4] sm:$0xf]
        %v1943 = vld [vmem:[%s1940 + $0x8] sm:$0xf]
        %v1944 = vld [vmem:[%s1940 + $0xc] sm:$0xf]
        %v1945 = vld [vmem:[%s1940 + $0x10] sm:$0xf]
        %v1946 = vld [vmem:[%s1940 + $0x14] sm:$0xf]
        %v1947 = vld [vmem:[%s1940 + $0x18] sm:$0xf]
        %v1948 = vld [vmem:[%s1940 + $0x1c] sm:$0xf]
        %v1949 = vld [vmem:[%s1940 + $0x20] sm:$0xf]
        %v1950 = vld [vmem:[%s1940 + $0x24] sm:$0xf]
        %v1951 = vld [vmem:[%s1940 + $0x28] sm:$0xf]
        %v1952 = vld [vmem:[%s1940 + $0x2c] sm:$0xf]
        %v1953 = vld [vmem:[%s1940 + $0x30] sm:$0xf]
        %v1954 = vld [vmem:[%s1940 + $0x34] sm:$0xf]
        %v1955 = vld [vmem:[%s1940 + $0x38] sm:$0xf]
        %v1956 = vld [vmem:[%s1940 + $0x3c] sm:$0xf]
        %v1957 = vld [vmem:[%s1940 + $0x40] sm:$0xf]
        %v1958 = vld [vmem:[%s1940 + $0x44] sm:$0xf]
        %v1959 = vld [vmem:[%s1940 + $0x48] sm:$0xf]
        %v1960 = vld [vmem:[%s1940 + $0x4c] sm:$0xf]
        %v1961 = vld [vmem:[%s1940 + $0x50] sm:$0xf]
        %v1962 = vld [vmem:[%s1940 + $0x54] sm:$0xf]
        %v1963 = vld [vmem:[%s1940 + $0x58] sm:$0xf]
        %v1964 = vld [vmem:[%s1940 + $0x5c] sm:$0xf]
        %v1965 = vld [vmem:[%s1940 + $0x60] sm:$0xf]
        %v1966 = vld [vmem:[%s1940 + $0x64] sm:$0xf]
        %v1967 = vld [vmem:[%s1940 + $0x68] sm:$0xf]
        %v1968 = vld [vmem:[%s1940 + $0x6c] sm:$0xf]
        %v1969 = vld [vmem:[%s1940 + $0x70] sm:$0xf]
        %v1970 = vld [vmem:[%s1940 + $0x74] sm:$0xf]
        %v1971 = vld [vmem:[%s1940 + $0x78] sm:$0xf]
        %v1972 = vld [vmem:[%s1940 + $0x7c] sm:$0xf]
        %v1973 = vld [vmem:[%s1940 + $0x80] sm:$0xf]
        %v1974 = vld [vmem:[%s1940 + $0x84] sm:$0xf]
        %v1975 = vld [vmem:[%s1940 + $0x88] sm:$0xf]
        %v1976 = vld [vmem:[%s1940 + $0x8c] sm:$0xf]
        %v1977 = vld [vmem:[%s1940 + $0x90] sm:$0xf]
        %v1978 = vld [vmem:[%s1940 + $0x94] sm:$0xf]
        %v1979 = vld [vmem:[%s1940 + $0x98] sm:$0xf]
        %v1980 = vld [vmem:[%s1940 + $0x9c] sm:$0xf]
        %v1981 = vld [vmem:[%s1940 + $0xa0] sm:$0xf]
        %v1982 = vld [vmem:[%s1940 + $0xa4] sm:$0xf]
        %v1983 = vld [vmem:[%s1940 + $0xa8] sm:$0xf]
        %v1984 = vld [vmem:[%s1940 + $0xac] sm:$0xf]
        %v1985 = vld [vmem:[%s1940 + $0xb0] sm:$0xf]
        %v1986 = vld [vmem:[%s1940 + $0xb4] sm:$0xf]
        %v1987 = vld [vmem:[%s1940 + $0xb8] sm:$0xf]
        %v1988 = vld [vmem:[%s1940 + $0xbc] sm:$0xf]
        %v1989 = vld [vmem:[%s1940 + $0xc0] sm:$0xf]
        %v1990 = vld [vmem:[%s1940 + $0xc4] sm:$0xf]
        %v1991 = vld [vmem:[%s1940 + $0xc8] sm:$0xf]
        %v1992 = vld [vmem:[%s1940 + $0xcc] sm:$0xf]
        %v1993 = vld [vmem:[%s1940 + $0xd0] sm:$0xf]
        %v1994 = vld [vmem:[%s1940 + $0xd4] sm:$0xf]
        %v1995 = vld [vmem:[%s1940 + $0xd8] sm:$0xf]
        %v1996 = vld [vmem:[%s1940 + $0xdc] sm:$0xf]
        %v1997 = vld [vmem:[%s1940 + $0xe0] sm:$0xf]
        %v1998 = vld [vmem:[%s1940 + $0xe4] sm:$0xf]
        %v1999 = vld [vmem:[%s1940 + $0xe8] sm:$0xf]
        %v2000 = vld [vmem:[%s1940 + $0xec] sm:$0xf]
        %v2001 = vld [vmem:[%s1940 + $0xf0] sm:$0xf]
        %v2002 = vld [vmem:[%s1940 + $0xf4] sm:$0xf]
        %v2003 = vld [vmem:[%s1940 + $0xf8] sm:$0xf]
        %v2004 = vld [vmem:[%s1940 + $0xfc] sm:$0xf]
        %v2031 = vunpack.c.l.b16 %v1914
        %v2032 = vunpack.c.h.b16 %v1914
        %v2033 = vunpack.c.l.b16 %v1915
        %v2034 = vunpack.c.h.b16 %v1915
        %v2035 = vunpack.c.l.b16 %v1916
        %v2036 = vunpack.c.h.b16 %v1916
        %v2037 = vunpack.c.l.b16 %v1917
        %v2038 = vunpack.c.h.b16 %v1917
        %v2039 = vunpack.c.l.b16 %v1918
        %v2040 = vunpack.c.h.b16 %v1918
        %v2041 = vunpack.c.l.b16 %v1919
        %v2042 = vunpack.c.h.b16 %v1919
        %v2043 = vunpack.c.l.b16 %v1920
        %v2044 = vunpack.c.h.b16 %v1920
        %v2045 = vunpack.c.l.b16 %v1921
        %v2046 = vunpack.c.h.b16 %v1921
        %v2047 = vunpack.c.l.b16 %v1922
        %v2048 = vunpack.c.h.b16 %v1922
        %v2049 = vunpack.c.l.b16 %v1923
        %v2050 = vunpack.c.h.b16 %v1923
        %v2051 = vunpack.c.l.b16 %v1924
        %v2052 = vunpack.c.h.b16 %v1924
        %v2053 = vunpack.c.l.b16 %v1925
        %v2054 = vunpack.c.h.b16 %v1925
        %v2055 = vunpack.c.l.b16 %v1926
        %v2056 = vunpack.c.h.b16 %v1926
        %v2057 = vunpack.c.l.b16 %v1927
        %v2058 = vunpack.c.h.b16 %v1927
        %v2059 = vunpack.c.l.b16 %v1928
        %v2060 = vunpack.c.h.b16 %v1928
        %v2061 = vunpack.c.l.b16 %v1929
        %v2062 = vunpack.c.h.b16 %v1929
        %v2063 = vunpack.c.l.b16 %v1930
        %v2064 = vunpack.c.h.b16 %v1930
        %v2065 = vunpack.c.l.b16 %v1931
        %v2066 = vunpack.c.h.b16 %v1931
        %v2067 = vunpack.c.l.b16 %v1932
        %v2068 = vunpack.c.h.b16 %v1932
        %v2069 = vunpack.c.l.b16 %v1933
        %v2070 = vunpack.c.h.b16 %v1933
        %v2071 = vunpack.c.l.b16 %v1934
        %v2072 = vunpack.c.h.b16 %v1934
        %v2073 = vunpack.c.l.b16 %v1935
        %v2074 = vunpack.c.h.b16 %v1935
        %v2075 = vunpack.c.l.b16 %v1936
        %v2076 = vunpack.c.h.b16 %v1936
        %v2077 = vunpack.c.l.b16 %v1937
        %v2078 = vunpack.c.h.b16 %v1937
        %v2079 = vunpack.c.l.b16 %v1938
        %v2080 = vunpack.c.h.b16 %v1938
        %v2081 = vunpack.c.l.b16 %v1939
        %v2082 = vunpack.c.h.b16 %v1939
        %v2083 = vpack.c.b16 %v2035, %v2031
        %v2084 = vpack.c.b16 %v2036, %v2032
        %v2085 = vpack.c.b16 %v2037, %v2033
        %v2086 = vpack.c.b16 %v2038, %v2034
        %v2087 = vpack.c.b16 %v2043, %v2039
        %v2088 = vpack.c.b16 %v2044, %v2040
        %v2089 = vpack.c.b16 %v2045, %v2041
        %v2090 = vpack.c.b16 %v2046, %v2042
        %v2091 = vpack.c.b16 %v2051, %v2047
        %v2092 = vpack.c.b16 %v2052, %v2048
        %v2093 = vpack.c.b16 %v2053, %v2049
        %v2094 = vpack.c.b16 %v2054, %v2050
        %v2095 = vpack.c.b16 %v2059, %v2055
        %v2096 = vpack.c.b16 %v2060, %v2056
        %v2097 = vpack.c.b16 %v2061, %v2057
        %v2098 = vpack.c.b16 %v2062, %v2058
        %v2099 = vpack.c.b16 %v2067, %v2063
        %v2100 = vpack.c.b16 %v2068, %v2064
        %v2101 = vpack.c.b16 %v2069, %v2065
        %v2102 = vpack.c.b16 %v2070, %v2066
        %v2103 = vpack.c.b16 %v2075, %v2071
        %v2104 = vpack.c.b16 %v2076, %v2072
        %v2105 = vpack.c.b16 %v2077, %v2073
        %v2106 = vpack.c.b16 %v2078, %v2074
        %v2107 = vpack.c.b16 %v2079, %v2079
        %v2108 = vpack.c.b16 %v2080, %v2080
        %v2109 = vpack.c.b16 %v2081, %v2081
        %v2110 = vpack.c.b16 %v2082, %v2082
        %v2203 = vunpack.c.l.b16 %v1941
        %v2204 = vunpack.c.l.b16 %v1942
        %v2205 = vunpack.c.l.b16 %v1943
        %v2206 = vunpack.c.l.b16 %v1944
        %v2207 = vunpack.c.l.b16 %v1945
        %v2208 = vunpack.c.l.b16 %v1946
        %v2209 = vunpack.c.l.b16 %v1947
        %v2210 = vunpack.c.l.b16 %v1948
        %v2211 = vunpack.c.l.b16 %v1949
        %v2212 = vunpack.c.l.b16 %v1950
        %v2213 = vunpack.c.l.b16 %v1951
        %v2214 = vunpack.c.l.b16 %v1952
        %v2215 = vunpack.c.l.b16 %v1953
        %v2216 = vunpack.c.l.b16 %v1954
        %v2217 = vunpack.c.l.b16 %v1955
        %v2218 = vunpack.c.l.b16 %v1956
        %v2219 = vunpack.c.l.b16 %v1957
        %v2220 = vunpack.c.l.b16 %v1958
        %v2221 = vunpack.c.l.b16 %v1959
        %v2222 = vunpack.c.l.b16 %v1960
        %v2223 = vunpack.c.l.b16 %v1961
        %v2224 = vunpack.c.l.b16 %v1962
        %v2225 = vunpack.c.l.b16 %v1963
        %v2226 = vunpack.c.l.b16 %v1964
        %v2227 = vunpack.c.l.b16 %v1965
        %v2228 = vunpack.c.l.b16 %v1966
        %v2229 = vunpack.c.l.b16 %v1967
        %v2230 = vunpack.c.l.b16 %v1968
        %v2231 = vunpack.c.l.b16 %v1969
        %v2232 = vunpack.c.l.b16 %v1970
        %v2233 = vunpack.c.l.b16 %v1971
        %v2234 = vunpack.c.l.b16 %v1972
        %v2235 = vunpack.c.l.b16 %v1973
        %v2236 = vunpack.c.l.b16 %v1974
        %v2237 = vunpack.c.l.b16 %v1975
        %v2238 = vunpack.c.l.b16 %v1976
        %v2239 = vunpack.c.l.b16 %v1977
        %v2240 = vunpack.c.l.b16 %v1978
        %v2241 = vunpack.c.l.b16 %v1979
        %v2242 = vunpack.c.l.b16 %v1980
        %v2243 = vunpack.c.l.b16 %v1981
        %v2244 = vunpack.c.l.b16 %v1982
        %v2245 = vunpack.c.l.b16 %v1983
        %v2246 = vunpack.c.l.b16 %v1984
        %v2247 = vunpack.c.l.b16 %v1985
        %v2248 = vunpack.c.l.b16 %v1986
        %v2249 = vunpack.c.l.b16 %v1987
        %v2250 = vunpack.c.l.b16 %v1988
        %v2251 = vunpack.c.l.b16 %v1989
        %v2252 = vunpack.c.l.b16 %v1990
        %v2253 = vunpack.c.l.b16 %v1991
        %v2254 = vunpack.c.l.b16 %v1992
        %v2255 = vunpack.c.l.b16 %v1993
        %v2256 = vunpack.c.l.b16 %v1994
        %v2257 = vunpack.c.l.b16 %v1995
        %v2258 = vunpack.c.l.b16 %v1996
        %v2259 = vunpack.c.l.b16 %v1997
        %v2260 = vunpack.c.l.b16 %v1998
        %v2261 = vunpack.c.l.b16 %v1999
        %v2262 = vunpack.c.l.b16 %v2000
        %v2263 = vunpack.c.l.b16 %v2001
        %v2264 = vunpack.c.l.b16 %v2002
        %v2265 = vunpack.c.l.b16 %v2003
        %v2266 = vunpack.c.l.b16 %v2004
        %v2267 = vpack.c.b16 %v2204, %v2203
        %v2268 = vpack.c.b16 %v2206, %v2205
        %v2269 = vpack.c.b16 %v2208, %v2207
        %v2270 = vpack.c.b16 %v2210, %v2209
        %v2271 = vpack.c.b16 %v2212, %v2211
        %v2272 = vpack.c.b16 %v2214, %v2213
        %v2273 = vpack.c.b16 %v2216, %v2215
        %v2274 = vpack.c.b16 %v2218, %v2217
        %v2275 = vpack.c.b16 %v2220, %v2219
        %v2276 = vpack.c.b16 %v2222, %v2221
        %v2277 = vpack.c.b16 %v2224, %v2223
        %v2278 = vpack.c.b16 %v2226, %v2225
        %v2279 = vpack.c.b16 %v2228, %v2227
        %v2280 = vpack.c.b16 %v2230, %v2229
        %v2281 = vpack.c.b16 %v2232, %v2231
        %v2282 = vpack.c.b16 %v2234, %v2233
        %v2283 = vpack.c.b16 %v2236, %v2235
        %v2284 = vpack.c.b16 %v2238, %v2237
        %v2285 = vpack.c.b16 %v2240, %v2239
        %v2286 = vpack.c.b16 %v2242, %v2241
        %v2287 = vpack.c.b16 %v2244, %v2243
        %v2288 = vpack.c.b16 %v2246, %v2245
        %v2289 = vpack.c.b16 %v2248, %v2247
        %v2290 = vpack.c.b16 %v2250, %v2249
        %v2291 = vpack.c.b16 %v2252, %v2251
        %v2292 = vpack.c.b16 %v2254, %v2253
        %v2293 = vpack.c.b16 %v2256, %v2255
        %v2294 = vpack.c.b16 %v2258, %v2257
        %v2295 = vpack.c.b16 %v2260, %v2259
        %v2296 = vpack.c.b16 %v2262, %v2261
        %v2297 = vpack.c.b16 %v2264, %v2263
        %v2298 = vpack.c.b16 %v2266, %v2265
        %2331 = vmatprep.subr.bf16.mxu0 0
        %2332 = vmatpush1.bf16.msra.mxu0 %v2274
        %2333 = vmatprep.subr.bf16.mxu0 0
        %2334 = vmatpush1.bf16.msra.mxu0 %v2273
        %2335 = vmatprep.subr.bf16.mxu0 0
        %2336 = vmatpush1.bf16.msra.mxu0 %v2272
        %2337 = vmatprep.subr.bf16.mxu0 0
        %2338 = vmatpush1.bf16.msra.mxu0 %v2271
        %2339 = vmatprep.subr.bf16.mxu0 0
        %2340 = vmatpush1.bf16.msra.mxu0 %v2270
        %2341 = vmatprep.subr.bf16.mxu0 0
        %2342 = vmatpush1.bf16.msra.mxu0 %v2269
        %2343 = vmatprep.subr.bf16.mxu0 0
        %2344 = vmatpush1.bf16.msra.mxu0 %v2268
        %2345 = vmatprep.subr.bf16.mxu0 0
        %2346 = vmatpush1.bf16.msra.mxu0 %v2267
        %2347 = vmatprep.subr.bf16.mxu0 0
        %2348 = vmatpush2.bf16.msra.mxu0 %v2282
        %2349 = vmatprep.subr.bf16.mxu0 0
        %2350 = vmatpush2.bf16.msra.mxu0 %v2281
        %2351 = vmatprep.subr.bf16.mxu0 0
        %2352 = vmatpush2.bf16.msra.mxu0 %v2280
        %2353 = vmatprep.subr.bf16.mxu0 0
        %2354 = vmatpush2.bf16.msra.mxu0 %v2279
        %2355 = vmatprep.subr.bf16.mxu0 0
        %2356 = vmatpush2.bf16.msra.mxu0 %v2278
        %2357 = vmatprep.subr.bf16.mxu0 0
        %2358 = vmatpush2.bf16.msra.mxu0 %v2277
        %2359 = vmatprep.subr.bf16.mxu0 0
        %2360 = vmatpush2.bf16.msra.mxu0 %v2276
        %2361 = vmatprep.subr.bf16.mxu0 0
        %2362 = vmatpush2.bf16.msra.mxu0 %v2275
        %2363 = vmatprep.mubr.bf16.mxu0 %v2084
        %2364 = vmatmul.mubr.bf16.gmra.mxu0 %v2083
        %v2365 = vpop.f32.mrf.mxu0
        %v2366 = vadd.f32 0.0, %v2365
        %v2367 = vpop.f32.mrf.mxu0
        %v2368 = vpop.f32.mrf.mxu0
        %v2369 = vadd.f32 0.0, %v2368
        %v2370 = vpop.f32.mrf.mxu0
        %2371 = vmatprep.mubr.bf16.mxu0 %v2088
        %2372 = vmatmul.mubr.bf16.gmra.mxu0 %v2087
        %v2373 = vpop.f32.mrf.mxu0
        %v2374 = vadd.f32 0.0, %v2373
        %v2375 = vpop.f32.mrf.mxu0
        %v2376 = vpop.f32.mrf.mxu0
        %v2377 = vadd.f32 0.0, %v2376
        %v2378 = vpop.f32.mrf.mxu0
        %2379 = vmatprep.mubr.bf16.mxu0 %v2092
        %2380 = vmatmul.mubr.bf16.gmra.mxu0 %v2091
        %v2381 = vpop.f32.mrf.mxu0
        %v2382 = vadd.f32 0.0, %v2381
        %v2383 = vpop.f32.mrf.mxu0
        %v2384 = vpop.f32.mrf.mxu0
        %v2385 = vadd.f32 0.0, %v2384
        %v2386 = vpop.f32.mrf.mxu0
        %2387 = vmatprep.mubr.bf16.mxu0 %v2096
        %2388 = vmatmul.mubr.bf16.gmra.mxu0 %v2095
        %v2389 = vpop.f32.mrf.mxu0
        %v2390 = vadd.f32 0.0, %v2389
        %v2391 = vpop.f32.mrf.mxu0
        %v2392 = vpop.f32.mrf.mxu0
        %v2393 = vadd.f32 0.0, %v2392
        %v2394 = vpop.f32.mrf.mxu0
        %2395 = vmatprep.mubr.bf16.mxu0 %v2100
        %2396 = vmatmul.mubr.bf16.gmra.mxu0 %v2099
        %v2397 = vpop.f32.mrf.mxu0
        %v2398 = vadd.f32 0.0, %v2397
        %v2399 = vpop.f32.mrf.mxu0
        %v2400 = vpop.f32.mrf.mxu0
        %v2401 = vadd.f32 0.0, %v2400
        %v2402 = vpop.f32.mrf.mxu0
        %2403 = vmatprep.mubr.bf16.mxu0 %v2104
        %2404 = vmatmul.mubr.bf16.gmra.mxu0 %v2103
        %v2405 = vpop.f32.mrf.mxu0
        %v2406 = vadd.f32 0.0, %v2405
        %v2407 = vpop.f32.mrf.mxu0
        %v2408 = vpop.f32.mrf.mxu0
        %v2409 = vadd.f32 0.0, %v2408
        %v2410 = vpop.f32.mrf.mxu0
        %2411 = vmatprep.mubr.bf16.mxu0 %v2108
        %2412 = vmatmul.mubr.bf16.gmra.mxu0 %v2107
        %v2413 = vpop.f32.mrf.mxu0
        %v2414 = vadd.f32 0.0, %v2413
        %v2415 = vpop.f32.mrf.mxu0
        %v2416 = vpop.f32.mrf.mxu0
        %v2417 = vpop.f32.mrf.mxu0
        %2418 = vdwg.mxu0
        %2419 = vmatprep.subr.bf16.mxu0 0
        %2420 = vmatpush1.bf16.msra.mxu0 %v2290
        %2421 = vmatprep.subr.bf16.mxu0 0
        %2422 = vmatpush1.bf16.msra.mxu0 %v2289
        %2423 = vmatprep.subr.bf16.mxu0 0
        %2424 = vmatpush1.bf16.msra.mxu0 %v2288
        %2425 = vmatprep.subr.bf16.mxu0 0
        %2426 = vmatpush1.bf16.msra.mxu0 %v2287
        %2427 = vmatprep.subr.bf16.mxu0 0
        %2428 = vmatpush1.bf16.msra.mxu0 %v2286
        %2429 = vmatprep.subr.bf16.mxu0 0
        %2430 = vmatpush1.bf16.msra.mxu0 %v2285
        %2431 = vmatprep.subr.bf16.mxu0 0
        %2432 = vmatpush1.bf16.msra.mxu0 %v2284
        %2433 = vmatprep.subr.bf16.mxu0 0
        %2434 = vmatpush1.bf16.msra.mxu0 %v2283
        %2435 = vmatprep.subr.bf16.mxu0 0
        %2436 = vmatpush2.bf16.msra.mxu0 %v2298
        %2437 = vmatprep.subr.bf16.mxu0 0
        %2438 = vmatpush2.bf16.msra.mxu0 %v2297
        %2439 = vmatprep.subr.bf16.mxu0 0
        %2440 = vmatpush2.bf16.msra.mxu0 %v2296
        %2441 = vmatprep.subr.bf16.mxu0 0
        %2442 = vmatpush2.bf16.msra.mxu0 %v2295
        %2443 = vmatprep.subr.bf16.mxu0 0
        %2444 = vmatpush2.bf16.msra.mxu0 %v2294
        %2445 = vmatprep.subr.bf16.mxu0 0
        %2446 = vmatpush2.bf16.msra.mxu0 %v2293
        %2447 = vmatprep.subr.bf16.mxu0 0
        %2448 = vmatpush2.bf16.msra.mxu0 %v2292
        %2449 = vmatprep.subr.bf16.mxu0 0
        %2450 = vmatpush2.bf16.msra.mxu0 %v2291
        %2451 = vmatprep.mubr.bf16.mxu0 %v2086
        %2452 = vmatmul.mubr.bf16.gmra.mxu0 %v2085
        %v2453 = vpop.f32.mrf.mxu0
        %v2454 = vadd.f32 %v2366, %v2453
        %v2455 = vpop.f32.mrf.mxu0
        %v2456 = vpop.f32.mrf.mxu0
        %v2457 = vadd.f32 %v2369, %v2456
        %v2458 = vpop.f32.mrf.mxu0
        %2459 = vmatprep.mubr.bf16.mxu0 %v2090
        %2460 = vmatmul.mubr.bf16.gmra.mxu0 %v2089
        %v2461 = vpop.f32.mrf.mxu0
        %v2462 = vadd.f32 %v2374, %v2461
        %v2463 = vpop.f32.mrf.mxu0
        %v2464 = vpop.f32.mrf.mxu0
        %v2465 = vadd.f32 %v2377, %v2464
        %v2466 = vpop.f32.mrf.mxu0
        %2467 = vmatprep.mubr.bf16.mxu0 %v2094
        %2468 = vmatmul.mubr.bf16.gmra.mxu0 %v2093
        %v2469 = vpop.f32.mrf.mxu0
        %v2470 = vadd.f32 %v2382, %v2469
        %v2471 = vpop.f32.mrf.mxu0
        %v2472 = vpop.f32.mrf.mxu0
        %v2473 = vadd.f32 %v2385, %v2472
        %v2474 = vpop.f32.mrf.mxu0
        %2475 = vmatprep.mubr.bf16.mxu0 %v2098
        %2476 = vmatmul.mubr.bf16.gmra.mxu0 %v2097
        %v2477 = vpop.f32.mrf.mxu0
        %v2478 = vadd.f32 %v2390, %v2477
        %v2479 = vpop.f32.mrf.mxu0
        %v2480 = vpop.f32.mrf.mxu0
        %v2481 = vadd.f32 %v2393, %v2480
        %v2482 = vpop.f32.mrf.mxu0
        %2483 = vmatprep.mubr.bf16.mxu0 %v2102
        %2484 = vmatmul.mubr.bf16.gmra.mxu0 %v2101
        %v2485 = vpop.f32.mrf.mxu0
        %v2486 = vadd.f32 %v2398, %v2485
        %v2487 = vpop.f32.mrf.mxu0
        %v2488 = vpop.f32.mrf.mxu0
        %v2489 = vadd.f32 %v2401, %v2488
        %v2490 = vpop.f32.mrf.mxu0
        %2491 = vmatprep.mubr.bf16.mxu0 %v2106
        %2492 = vmatmul.mubr.bf16.gmra.mxu0 %v2105
        %v2493 = vpop.f32.mrf.mxu0
        %v2494 = vadd.f32 %v2406, %v2493
        %v2495 = vpop.f32.mrf.mxu0
        %v2496 = vpop.f32.mrf.mxu0
        %v2497 = vadd.f32 %v2409, %v2496
        %v2498 = vpop.f32.mrf.mxu0
        %2499 = vmatprep.mubr.bf16.mxu0 %v2110
        %2500 = vmatmul.mubr.bf16.gmra.mxu0 %v2109
        %v2501 = vpop.f32.mrf.mxu0
        %v2502 = vadd.f32 %v2414, %v2501
        %v2503 = vpop.f32.mrf.mxu0
        %v2504 = vpop.f32.mrf.mxu0
        %v2505 = vpop.f32.mrf.mxu0
        %2506 = vdwg.mxu0
        %v2507 = vadd.f32 %v1901, %v2454
        %v2508 = vadd.f32 %v1902, %v2457
        %v2509 = vadd.f32 %v1903, %v2462
        %v2510 = vadd.f32 %v1904, %v2465
        %v2511 = vadd.f32 %v1905, %v2470
        %v2512 = vadd.f32 %v1906, %v2473
        %v2513 = vadd.f32 %v1907, %v2478
        %v2514 = vadd.f32 %v1908, %v2481
        %v2515 = vadd.f32 %v1909, %v2486
        %v2516 = vadd.f32 %v1910, %v2489
        %v2517 = vadd.f32 %v1911, %v2494
        %v2518 = vadd.f32 %v1912, %v2497
        %v2519 = vadd.f32 %v1913, %v2502
        %v2520 = vld [vmem:[%s218 + $0x40] sm:$0xff]
        %v2521 = vld [vmem:[%s218 + $0x48] sm:$0xff]
        %v2522 = vld [vmem:[%s218 + $0x50] sm:$0xff]
        %v2523 = vld [vmem:[%s218 + $0x58] sm:$0xff]
        %v2524 = vld [vmem:[%s218 + $0x60] sm:$0xff]
        %v2525 = vld [vmem:[%s218 + $0x68] sm:$0xff]
        %v2526 = vld [vmem:[%s218 + $0x70] sm:$0xff]
        %v2527 = vld [vmem:[%s218 + $0x78] sm:$0xff]
        %v2528 = vld [vmem:[%s218 + $0x80] sm:$0xff]
        %v2529 = vld [vmem:[%s218 + $0x88] sm:$0xff]
        %v2530 = vld [vmem:[%s218 + $0x90] sm:$0xff]
        %v2531 = vld [vmem:[%s218 + $0x98] sm:$0xff]
        %v2532 = vld [vmem:[%s218 + $0xa0] sm:$0xff]
        %v2533 = vld [vmem:[%s218 + $0xa8] sm:$0xff]
        %v2534 = vld [vmem:[%s218 + $0xb0] sm:$0xff]
        %v2535 = vld [vmem:[%s218 + $0xb8] sm:$0xff]
        %v2536 = vld [vmem:[%s218 + $0xc0] sm:$0xff]
        %v2537 = vld [vmem:[%s218 + $0xc8] sm:$0xff]
        %v2538 = vld [vmem:[%s218 + $0xd0] sm:$0xff]
        %v2539 = vld [vmem:[%s218 + $0xd8] sm:$0xff]
        %v2540 = vld [vmem:[%s218 + $0xe0] sm:$0xff]
        %v2541 = vld [vmem:[%s218 + $0xe8] sm:$0xff]
        %v2542 = vld [vmem:[%s218 + $0xf0] sm:$0xff]
        %v2543 = vld [vmem:[%s218 + $0xf8] sm:$0xff]
        %v2544 = vld [vmem:[%s218 + $0x100] sm:$0xff]
        %v2545 = vld [vmem:[%s218 + $0x108] sm:$0xff]
        %s2546 = scalar_lea.vmem %s1, 1024
        %v2547 = vld [vmem:[%s2546] sm:$0xf]
        %v2548 = vld [vmem:[%s2546 + $0x4] sm:$0xf]
        %v2549 = vld [vmem:[%s2546 + $0x8] sm:$0xf]
        %v2550 = vld [vmem:[%s2546 + $0xc] sm:$0xf]
        %v2551 = vld [vmem:[%s2546 + $0x10] sm:$0xf]
        %v2552 = vld [vmem:[%s2546 + $0x14] sm:$0xf]
        %v2553 = vld [vmem:[%s2546 + $0x18] sm:$0xf]
        %v2554 = vld [vmem:[%s2546 + $0x1c] sm:$0xf]
        %v2555 = vld [vmem:[%s2546 + $0x20] sm:$0xf]
        %v2556 = vld [vmem:[%s2546 + $0x24] sm:$0xf]
        %v2557 = vld [vmem:[%s2546 + $0x28] sm:$0xf]
        %v2558 = vld [vmem:[%s2546 + $0x2c] sm:$0xf]
        %v2559 = vld [vmem:[%s2546 + $0x30] sm:$0xf]
        %v2560 = vld [vmem:[%s2546 + $0x34] sm:$0xf]
        %v2561 = vld [vmem:[%s2546 + $0x38] sm:$0xf]
        %v2562 = vld [vmem:[%s2546 + $0x3c] sm:$0xf]
        %v2563 = vld [vmem:[%s2546 + $0x40] sm:$0xf]
        %v2564 = vld [vmem:[%s2546 + $0x44] sm:$0xf]
        %v2565 = vld [vmem:[%s2546 + $0x48] sm:$0xf]
        %v2566 = vld [vmem:[%s2546 + $0x4c] sm:$0xf]
        %v2567 = vld [vmem:[%s2546 + $0x50] sm:$0xf]
        %v2568 = vld [vmem:[%s2546 + $0x54] sm:$0xf]
        %v2569 = vld [vmem:[%s2546 + $0x58] sm:$0xf]
        %v2570 = vld [vmem:[%s2546 + $0x5c] sm:$0xf]
        %v2571 = vld [vmem:[%s2546 + $0x60] sm:$0xf]
        %v2572 = vld [vmem:[%s2546 + $0x64] sm:$0xf]
        %v2573 = vld [vmem:[%s2546 + $0x68] sm:$0xf]
        %v2574 = vld [vmem:[%s2546 + $0x6c] sm:$0xf]
        %v2575 = vld [vmem:[%s2546 + $0x70] sm:$0xf]
        %v2576 = vld [vmem:[%s2546 + $0x74] sm:$0xf]
        %v2577 = vld [vmem:[%s2546 + $0x78] sm:$0xf]
        %v2578 = vld [vmem:[%s2546 + $0x7c] sm:$0xf]
        %v2579 = vld [vmem:[%s2546 + $0x80] sm:$0xf]
        %v2580 = vld [vmem:[%s2546 + $0x84] sm:$0xf]
        %v2581 = vld [vmem:[%s2546 + $0x88] sm:$0xf]
        %v2582 = vld [vmem:[%s2546 + $0x8c] sm:$0xf]
        %v2583 = vld [vmem:[%s2546 + $0x90] sm:$0xf]
        %v2584 = vld [vmem:[%s2546 + $0x94] sm:$0xf]
        %v2585 = vld [vmem:[%s2546 + $0x98] sm:$0xf]
        %v2586 = vld [vmem:[%s2546 + $0x9c] sm:$0xf]
        %v2587 = vld [vmem:[%s2546 + $0xa0] sm:$0xf]
        %v2588 = vld [vmem:[%s2546 + $0xa4] sm:$0xf]
        %v2589 = vld [vmem:[%s2546 + $0xa8] sm:$0xf]
        %v2590 = vld [vmem:[%s2546 + $0xac] sm:$0xf]
        %v2591 = vld [vmem:[%s2546 + $0xb0] sm:$0xf]
        %v2592 = vld [vmem:[%s2546 + $0xb4] sm:$0xf]
        %v2593 = vld [vmem:[%s2546 + $0xb8] sm:$0xf]
        %v2594 = vld [vmem:[%s2546 + $0xbc] sm:$0xf]
        %v2595 = vld [vmem:[%s2546 + $0xc0] sm:$0xf]
        %v2596 = vld [vmem:[%s2546 + $0xc4] sm:$0xf]
        %v2597 = vld [vmem:[%s2546 + $0xc8] sm:$0xf]
        %v2598 = vld [vmem:[%s2546 + $0xcc] sm:$0xf]
        %v2599 = vld [vmem:[%s2546 + $0xd0] sm:$0xf]
        %v2600 = vld [vmem:[%s2546 + $0xd4] sm:$0xf]
        %v2601 = vld [vmem:[%s2546 + $0xd8] sm:$0xf]
        %v2602 = vld [vmem:[%s2546 + $0xdc] sm:$0xf]
        %v2603 = vld [vmem:[%s2546 + $0xe0] sm:$0xf]
        %v2604 = vld [vmem:[%s2546 + $0xe4] sm:$0xf]
        %v2605 = vld [vmem:[%s2546 + $0xe8] sm:$0xf]
        %v2606 = vld [vmem:[%s2546 + $0xec] sm:$0xf]
        %v2607 = vld [vmem:[%s2546 + $0xf0] sm:$0xf]
        %v2608 = vld [vmem:[%s2546 + $0xf4] sm:$0xf]
        %v2609 = vld [vmem:[%s2546 + $0xf8] sm:$0xf]
        %v2610 = vld [vmem:[%s2546 + $0xfc] sm:$0xf]
        %v2637 = vunpack.c.l.b16 %v2520
        %v2638 = vunpack.c.h.b16 %v2520
        %v2639 = vunpack.c.l.b16 %v2521
        %v2640 = vunpack.c.h.b16 %v2521
        %v2641 = vunpack.c.l.b16 %v2522
        %v2642 = vunpack.c.h.b16 %v2522
        %v2643 = vunpack.c.l.b16 %v2523
        %v2644 = vunpack.c.h.b16 %v2523
        %v2645 = vunpack.c.l.b16 %v2524
        %v2646 = vunpack.c.h.b16 %v2524
        %v2647 = vunpack.c.l.b16 %v2525
        %v2648 = vunpack.c.h.b16 %v2525
        %v2649 = vunpack.c.l.b16 %v2526
        %v2650 = vunpack.c.h.b16 %v2526
        %v2651 = vunpack.c.l.b16 %v2527
        %v2652 = vunpack.c.h.b16 %v2527
        %v2653 = vunpack.c.l.b16 %v2528
        %v2654 = vunpack.c.h.b16 %v2528
        %v2655 = vunpack.c.l.b16 %v2529
        %v2656 = vunpack.c.h.b16 %v2529
        %v2657 = vunpack.c.l.b16 %v2530
        %v2658 = vunpack.c.h.b16 %v2530
        %v2659 = vunpack.c.l.b16 %v2531
        %v2660 = vunpack.c.h.b16 %v2531
        %v2661 = vunpack.c.l.b16 %v2532
        %v2662 = vunpack.c.h.b16 %v2532
        %v2663 = vunpack.c.l.b16 %v2533
        %v2664 = vunpack.c.h.b16 %v2533
        %v2665 = vunpack.c.l.b16 %v2534
        %v2666 = vunpack.c.h.b16 %v2534
        %v2667 = vunpack.c.l.b16 %v2535
        %v2668 = vunpack.c.h.b16 %v2535
        %v2669 = vunpack.c.l.b16 %v2536
        %v2670 = vunpack.c.h.b16 %v2536
        %v2671 = vunpack.c.l.b16 %v2537
        %v2672 = vunpack.c.h.b16 %v2537
        %v2673 = vunpack.c.l.b16 %v2538
        %v2674 = vunpack.c.h.b16 %v2538
        %v2675 = vunpack.c.l.b16 %v2539
        %v2676 = vunpack.c.h.b16 %v2539
        %v2677 = vunpack.c.l.b16 %v2540
        %v2678 = vunpack.c.h.b16 %v2540
        %v2679 = vunpack.c.l.b16 %v2541
        %v2680 = vunpack.c.h.b16 %v2541
        %v2681 = vunpack.c.l.b16 %v2542
        %v2682 = vunpack.c.h.b16 %v2542
        %v2683 = vunpack.c.l.b16 %v2543
        %v2684 = vunpack.c.h.b16 %v2543
        %v2685 = vunpack.c.l.b16 %v2544
        %v2686 = vunpack.c.h.b16 %v2544
        %v2687 = vunpack.c.l.b16 %v2545
        %v2688 = vunpack.c.h.b16 %v2545
        %v2689 = vpack.c.b16 %v2641, %v2637
        %v2690 = vpack.c.b16 %v2642, %v2638
        %v2691 = vpack.c.b16 %v2643, %v2639
        %v2692 = vpack.c.b16 %v2644, %v2640
        %v2693 = vpack.c.b16 %v2649, %v2645
        %v2694 = vpack.c.b16 %v2650, %v2646
        %v2695 = vpack.c.b16 %v2651, %v2647
        %v2696 = vpack.c.b16 %v2652, %v2648
        %v2697 = vpack.c.b16 %v2657, %v2653
        %v2698 = vpack.c.b16 %v2658, %v2654
        %v2699 = vpack.c.b16 %v2659, %v2655
        %v2700 = vpack.c.b16 %v2660, %v2656
        %v2701 = vpack.c.b16 %v2665, %v2661
        %v2702 = vpack.c.b16 %v2666, %v2662
        %v2703 = vpack.c.b16 %v2667, %v2663
        %v2704 = vpack.c.b16 %v2668, %v2664
        %v2705 = vpack.c.b16 %v2673, %v2669
        %v2706 = vpack.c.b16 %v2674, %v2670
        %v2707 = vpack.c.b16 %v2675, %v2671
        %v2708 = vpack.c.b16 %v2676, %v2672
        %v2709 = vpack.c.b16 %v2681, %v2677
        %v2710 = vpack.c.b16 %v2682, %v2678
        %v2711 = vpack.c.b16 %v2683, %v2679
        %v2712 = vpack.c.b16 %v2684, %v2680
        %v2713 = vpack.c.b16 %v2685, %v2685
        %v2714 = vpack.c.b16 %v2686, %v2686
        %v2715 = vpack.c.b16 %v2687, %v2687
        %v2716 = vpack.c.b16 %v2688, %v2688
        %v2809 = vunpack.c.l.b16 %v2547
        %v2810 = vunpack.c.l.b16 %v2548
        %v2811 = vunpack.c.l.b16 %v2549
        %v2812 = vunpack.c.l.b16 %v2550
        %v2813 = vunpack.c.l.b16 %v2551
        %v2814 = vunpack.c.l.b16 %v2552
        %v2815 = vunpack.c.l.b16 %v2553
        %v2816 = vunpack.c.l.b16 %v2554
        %v2817 = vunpack.c.l.b16 %v2555
        %v2818 = vunpack.c.l.b16 %v2556
        %v2819 = vunpack.c.l.b16 %v2557
        %v2820 = vunpack.c.l.b16 %v2558
        %v2821 = vunpack.c.l.b16 %v2559
        %v2822 = vunpack.c.l.b16 %v2560
        %v2823 = vunpack.c.l.b16 %v2561
        %v2824 = vunpack.c.l.b16 %v2562
        %v2825 = vunpack.c.l.b16 %v2563
        %v2826 = vunpack.c.l.b16 %v2564
        %v2827 = vunpack.c.l.b16 %v2565
        %v2828 = vunpack.c.l.b16 %v2566
        %v2829 = vunpack.c.l.b16 %v2567
        %v2830 = vunpack.c.l.b16 %v2568
        %v2831 = vunpack.c.l.b16 %v2569
        %v2832 = vunpack.c.l.b16 %v2570
        %v2833 = vunpack.c.l.b16 %v2571
        %v2834 = vunpack.c.l.b16 %v2572
        %v2835 = vunpack.c.l.b16 %v2573
        %v2836 = vunpack.c.l.b16 %v2574
        %v2837 = vunpack.c.l.b16 %v2575
        %v2838 = vunpack.c.l.b16 %v2576
        %v2839 = vunpack.c.l.b16 %v2577
        %v2840 = vunpack.c.l.b16 %v2578
        %v2841 = vunpack.c.l.b16 %v2579
        %v2842 = vunpack.c.l.b16 %v2580
        %v2843 = vunpack.c.l.b16 %v2581
        %v2844 = vunpack.c.l.b16 %v2582
        %v2845 = vunpack.c.l.b16 %v2583
        %v2846 = vunpack.c.l.b16 %v2584
        %v2847 = vunpack.c.l.b16 %v2585
        %v2848 = vunpack.c.l.b16 %v2586
        %v2849 = vunpack.c.l.b16 %v2587
        %v2850 = vunpack.c.l.b16 %v2588
        %v2851 = vunpack.c.l.b16 %v2589
        %v2852 = vunpack.c.l.b16 %v2590
        %v2853 = vunpack.c.l.b16 %v2591
        %v2854 = vunpack.c.l.b16 %v2592
        %v2855 = vunpack.c.l.b16 %v2593
        %v2856 = vunpack.c.l.b16 %v2594
        %v2857 = vunpack.c.l.b16 %v2595
        %v2858 = vunpack.c.l.b16 %v2596
        %v2859 = vunpack.c.l.b16 %v2597
        %v2860 = vunpack.c.l.b16 %v2598
        %v2861 = vunpack.c.l.b16 %v2599
        %v2862 = vunpack.c.l.b16 %v2600
        %v2863 = vunpack.c.l.b16 %v2601
        %v2864 = vunpack.c.l.b16 %v2602
        %v2865 = vunpack.c.l.b16 %v2603
        %v2866 = vunpack.c.l.b16 %v2604
        %v2867 = vunpack.c.l.b16 %v2605
        %v2868 = vunpack.c.l.b16 %v2606
        %v2869 = vunpack.c.l.b16 %v2607
        %v2870 = vunpack.c.l.b16 %v2608
        %v2871 = vunpack.c.l.b16 %v2609
        %v2872 = vunpack.c.l.b16 %v2610
        %v2873 = vpack.c.b16 %v2810, %v2809
        %v2874 = vpack.c.b16 %v2812, %v2811
        %v2875 = vpack.c.b16 %v2814, %v2813
        %v2876 = vpack.c.b16 %v2816, %v2815
        %v2877 = vpack.c.b16 %v2818, %v2817
        %v2878 = vpack.c.b16 %v2820, %v2819
        %v2879 = vpack.c.b16 %v2822, %v2821
        %v2880 = vpack.c.b16 %v2824, %v2823
        %v2881 = vpack.c.b16 %v2826, %v2825
        %v2882 = vpack.c.b16 %v2828, %v2827
        %v2883 = vpack.c.b16 %v2830, %v2829
        %v2884 = vpack.c.b16 %v2832, %v2831
        %v2885 = vpack.c.b16 %v2834, %v2833
        %v2886 = vpack.c.b16 %v2836, %v2835
        %v2887 = vpack.c.b16 %v2838, %v2837
        %v2888 = vpack.c.b16 %v2840, %v2839
        %v2889 = vpack.c.b16 %v2842, %v2841
        %v2890 = vpack.c.b16 %v2844, %v2843
        %v2891 = vpack.c.b16 %v2846, %v2845
        %v2892 = vpack.c.b16 %v2848, %v2847
        %v2893 = vpack.c.b16 %v2850, %v2849
        %v2894 = vpack.c.b16 %v2852, %v2851
        %v2895 = vpack.c.b16 %v2854, %v2853
        %v2896 = vpack.c.b16 %v2856, %v2855
        %v2897 = vpack.c.b16 %v2858, %v2857
        %v2898 = vpack.c.b16 %v2860, %v2859
        %v2899 = vpack.c.b16 %v2862, %v2861
        %v2900 = vpack.c.b16 %v2864, %v2863
        %v2901 = vpack.c.b16 %v2866, %v2865
        %v2902 = vpack.c.b16 %v2868, %v2867
        %v2903 = vpack.c.b16 %v2870, %v2869
        %v2904 = vpack.c.b16 %v2872, %v2871
        %2937 = vmatprep.subr.bf16.mxu0 0
        %2938 = vmatpush1.bf16.msra.mxu0 %v2880
        %2939 = vmatprep.subr.bf16.mxu0 0
        %2940 = vmatpush1.bf16.msra.mxu0 %v2879
        %2941 = vmatprep.subr.bf16.mxu0 0
        %2942 = vmatpush1.bf16.msra.mxu0 %v2878
        %2943 = vmatprep.subr.bf16.mxu0 0
        %2944 = vmatpush1.bf16.msra.mxu0 %v2877
        %2945 = vmatprep.subr.bf16.mxu0 0
        %2946 = vmatpush1.bf16.msra.mxu0 %v2876
        %2947 = vmatprep.subr.bf16.mxu0 0
        %2948 = vmatpush1.bf16.msra.mxu0 %v2875
        %2949 = vmatprep.subr.bf16.mxu0 0
        %2950 = vmatpush1.bf16.msra.mxu0 %v2874
        %2951 = vmatprep.subr.bf16.mxu0 0
        %2952 = vmatpush1.bf16.msra.mxu0 %v2873
        %2953 = vmatprep.subr.bf16.mxu0 0
        %2954 = vmatpush2.bf16.msra.mxu0 %v2888
        %2955 = vmatprep.subr.bf16.mxu0 0
        %2956 = vmatpush2.bf16.msra.mxu0 %v2887
        %2957 = vmatprep.subr.bf16.mxu0 0
        %2958 = vmatpush2.bf16.msra.mxu0 %v2886
        %2959 = vmatprep.subr.bf16.mxu0 0
        %2960 = vmatpush2.bf16.msra.mxu0 %v2885
        %2961 = vmatprep.subr.bf16.mxu0 0
        %2962 = vmatpush2.bf16.msra.mxu0 %v2884
        %2963 = vmatprep.subr.bf16.mxu0 0
        %2964 = vmatpush2.bf16.msra.mxu0 %v2883
        %2965 = vmatprep.subr.bf16.mxu0 0
        %2966 = vmatpush2.bf16.msra.mxu0 %v2882
        %2967 = vmatprep.subr.bf16.mxu0 0
        %2968 = vmatpush2.bf16.msra.mxu0 %v2881
        %2969 = vmatprep.mubr.bf16.mxu0 %v2690
        %2970 = vmatmul.mubr.bf16.gmra.mxu0 %v2689
        %v2971 = vpop.f32.mrf.mxu0
        %v2972 = vadd.f32 0.0, %v2971
        %v2973 = vpop.f32.mrf.mxu0
        %v2974 = vpop.f32.mrf.mxu0
        %v2975 = vadd.f32 0.0, %v2974
        %v2976 = vpop.f32.mrf.mxu0
        %2977 = vmatprep.mubr.bf16.mxu0 %v2694
        %2978 = vmatmul.mubr.bf16.gmra.mxu0 %v2693
        %v2979 = vpop.f32.mrf.mxu0
        %v2980 = vadd.f32 0.0, %v2979
        %v2981 = vpop.f32.mrf.mxu0
        %v2982 = vpop.f32.mrf.mxu0
        %v2983 = vadd.f32 0.0, %v2982
        %v2984 = vpop.f32.mrf.mxu0
        %2985 = vmatprep.mubr.bf16.mxu0 %v2698
        %2986 = vmatmul.mubr.bf16.gmra.mxu0 %v2697
        %v2987 = vpop.f32.mrf.mxu0
        %v2988 = vadd.f32 0.0, %v2987
        %v2989 = vpop.f32.mrf.mxu0
        %v2990 = vpop.f32.mrf.mxu0
        %v2991 = vadd.f32 0.0, %v2990
        %v2992 = vpop.f32.mrf.mxu0
        %2993 = vmatprep.mubr.bf16.mxu0 %v2702
        %2994 = vmatmul.mubr.bf16.gmra.mxu0 %v2701
        %v2995 = vpop.f32.mrf.mxu0
        %v2996 = vadd.f32 0.0, %v2995
        %v2997 = vpop.f32.mrf.mxu0
        %v2998 = vpop.f32.mrf.mxu0
        %v2999 = vadd.f32 0.0, %v2998
        %v3000 = vpop.f32.mrf.mxu0
        %3001 = vmatprep.mubr.bf16.mxu0 %v2706
        %3002 = vmatmul.mubr.bf16.gmra.mxu0 %v2705
        %v3003 = vpop.f32.mrf.mxu0
        %v3004 = vadd.f32 0.0, %v3003
        %v3005 = vpop.f32.mrf.mxu0
        %v3006 = vpop.f32.mrf.mxu0
        %v3007 = vadd.f32 0.0, %v3006
        %v3008 = vpop.f32.mrf.mxu0
        %3009 = vmatprep.mubr.bf16.mxu0 %v2710
        %3010 = vmatmul.mubr.bf16.gmra.mxu0 %v2709
        %v3011 = vpop.f32.mrf.mxu0
        %v3012 = vadd.f32 0.0, %v3011
        %v3013 = vpop.f32.mrf.mxu0
        %v3014 = vpop.f32.mrf.mxu0
        %v3015 = vadd.f32 0.0, %v3014
        %v3016 = vpop.f32.mrf.mxu0
        %3017 = vmatprep.mubr.bf16.mxu0 %v2714
        %3018 = vmatmul.mubr.bf16.gmra.mxu0 %v2713
        %v3019 = vpop.f32.mrf.mxu0
        %v3020 = vadd.f32 0.0, %v3019
        %v3021 = vpop.f32.mrf.mxu0
        %v3022 = vpop.f32.mrf.mxu0
        %v3023 = vpop.f32.mrf.mxu0
        %3024 = vdwg.mxu0
        %3025 = vmatprep.subr.bf16.mxu0 0
        %3026 = vmatpush1.bf16.msra.mxu0 %v2896
        %3027 = vmatprep.subr.bf16.mxu0 0
        %3028 = vmatpush1.bf16.msra.mxu0 %v2895
        %3029 = vmatprep.subr.bf16.mxu0 0
        %3030 = vmatpush1.bf16.msra.mxu0 %v2894
        %3031 = vmatprep.subr.bf16.mxu0 0
        %3032 = vmatpush1.bf16.msra.mxu0 %v2893
        %3033 = vmatprep.subr.bf16.mxu0 0
        %3034 = vmatpush1.bf16.msra.mxu0 %v2892
        %3035 = vmatprep.subr.bf16.mxu0 0
        %3036 = vmatpush1.bf16.msra.mxu0 %v2891
        %3037 = vmatprep.subr.bf16.mxu0 0
        %3038 = vmatpush1.bf16.msra.mxu0 %v2890
        %3039 = vmatprep.subr.bf16.mxu0 0
        %3040 = vmatpush1.bf16.msra.mxu0 %v2889
        %3041 = vmatprep.subr.bf16.mxu0 0
        %3042 = vmatpush2.bf16.msra.mxu0 %v2904
        %3043 = vmatprep.subr.bf16.mxu0 0
        %3044 = vmatpush2.bf16.msra.mxu0 %v2903
        %3045 = vmatprep.subr.bf16.mxu0 0
        %3046 = vmatpush2.bf16.msra.mxu0 %v2902
        %3047 = vmatprep.subr.bf16.mxu0 0
        %3048 = vmatpush2.bf16.msra.mxu0 %v2901
        %3049 = vmatprep.subr.bf16.mxu0 0
        %3050 = vmatpush2.bf16.msra.mxu0 %v2900
        %3051 = vmatprep.subr.bf16.mxu0 0
        %3052 = vmatpush2.bf16.msra.mxu0 %v2899
        %3053 = vmatprep.subr.bf16.mxu0 0
        %3054 = vmatpush2.bf16.msra.mxu0 %v2898
        %3055 = vmatprep.subr.bf16.mxu0 0
        %3056 = vmatpush2.bf16.msra.mxu0 %v2897
        %3057 = vmatprep.mubr.bf16.mxu0 %v2692
        %3058 = vmatmul.mubr.bf16.gmra.mxu0 %v2691
        %v3059 = vpop.f32.mrf.mxu0
        %v3060 = vadd.f32 %v2972, %v3059
        %v3061 = vpop.f32.mrf.mxu0
        %v3062 = vpop.f32.mrf.mxu0
        %v3063 = vadd.f32 %v2975, %v3062
        %v3064 = vpop.f32.mrf.mxu0
        %3065 = vmatprep.mubr.bf16.mxu0 %v2696
        %3066 = vmatmul.mubr.bf16.gmra.mxu0 %v2695
        %v3067 = vpop.f32.mrf.mxu0
        %v3068 = vadd.f32 %v2980, %v3067
        %v3069 = vpop.f32.mrf.mxu0
        %v3070 = vpop.f32.mrf.mxu0
        %v3071 = vadd.f32 %v2983, %v3070
        %v3072 = vpop.f32.mrf.mxu0
        %3073 = vmatprep.mubr.bf16.mxu0 %v2700
        %3074 = vmatmul.mubr.bf16.gmra.mxu0 %v2699
        %v3075 = vpop.f32.mrf.mxu0
        %v3076 = vadd.f32 %v2988, %v3075
        %v3077 = vpop.f32.mrf.mxu0
        %v3078 = vpop.f32.mrf.mxu0
        %v3079 = vadd.f32 %v2991, %v3078
        %v3080 = vpop.f32.mrf.mxu0
        %3081 = vmatprep.mubr.bf16.mxu0 %v2704
        %3082 = vmatmul.mubr.bf16.gmra.mxu0 %v2703
        %v3083 = vpop.f32.mrf.mxu0
        %v3084 = vadd.f32 %v2996, %v3083
        %v3085 = vpop.f32.mrf.mxu0
        %v3086 = vpop.f32.mrf.mxu0
        %v3087 = vadd.f32 %v2999, %v3086
        %v3088 = vpop.f32.mrf.mxu0
        %3089 = vmatprep.mubr.bf16.mxu0 %v2708
        %3090 = vmatmul.mubr.bf16.gmra.mxu0 %v2707
        %v3091 = vpop.f32.mrf.mxu0
        %v3092 = vadd.f32 %v3004, %v3091
        %v3093 = vpop.f32.mrf.mxu0
        %v3094 = vpop.f32.mrf.mxu0
        %v3095 = vadd.f32 %v3007, %v3094
        %v3096 = vpop.f32.mrf.mxu0
        %3097 = vmatprep.mubr.bf16.mxu0 %v2712
        %3098 = vmatmul.mubr.bf16.gmra.mxu0 %v2711
        %v3099 = vpop.f32.mrf.mxu0
        %v3100 = vadd.f32 %v3012, %v3099
        %v3101 = vpop.f32.mrf.mxu0
        %v3102 = vpop.f32.mrf.mxu0
        %v3103 = vadd.f32 %v3015, %v3102
        %v3104 = vpop.f32.mrf.mxu0
        %3105 = vmatprep.mubr.bf16.mxu0 %v2716
        %3106 = vmatmul.mubr.bf16.gmra.mxu0 %v2715
        %v3107 = vpop.f32.mrf.mxu0
        %v3108 = vadd.f32 %v3020, %v3107
        %v3109 = vpop.f32.mrf.mxu0
        %v3110 = vpop.f32.mrf.mxu0
        %v3111 = vpop.f32.mrf.mxu0
        %3112 = vdwg.mxu0
        %v3113 = vadd.f32 %v2507, %v3060
        %v3114 = vadd.f32 %v2508, %v3063
        %v3115 = vadd.f32 %v2509, %v3068
        %v3116 = vadd.f32 %v2510, %v3071
        %v3117 = vadd.f32 %v2511, %v3076
        %v3118 = vadd.f32 %v2512, %v3079
        %v3119 = vadd.f32 %v2513, %v3084
        %v3120 = vadd.f32 %v2514, %v3087
        %v3121 = vadd.f32 %v2515, %v3092
        %v3122 = vadd.f32 %v2516, %v3095
        %v3123 = vadd.f32 %v2517, %v3100
        %v3124 = vadd.f32 %v2518, %v3103
        %v3125 = vadd.f32 %v2519, %v3108
        %v3127 = vlaneseq
        %v3128 = vshrl.u32 %v3127, 7
        %v3129 = vsub.s32 0, %v3128
        %v3130 = vrot.slane %v207, %v3129
        %v3132 = vadd.f32 %v3113, %v3130
        %v3133 = vadd.f32 %v3114, %v3130
        %v3134 = vadd.f32 %v3115, %v3130
        %v3135 = vadd.f32 %v3116, %v3130
        %v3136 = vadd.f32 %v3117, %v3130
        %v3137 = vadd.f32 %v3118, %v3130
        %v3138 = vadd.f32 %v3119, %v3130
        %v3139 = vadd.f32 %v3120, %v3130
        %v3140 = vadd.f32 %v3121, %v3130
        %v3141 = vadd.f32 %v3122, %v3130
        %v3142 = vadd.f32 %v3123, %v3130
        %v3143 = vadd.f32 %v3124, %v3130
        %v3144 = vadd.f32 %v3125, %v3130
        %vm3145 = vcmp.gt.f32.partialorder %v3132, 0.0
        %vm3146 = vcmp.gt.f32.partialorder %v3133, 0.0
        %vm3147 = vcmp.gt.f32.partialorder %v3134, 0.0
        %vm3148 = vcmp.gt.f32.partialorder %v3135, 0.0
        %vm3149 = vcmp.gt.f32.partialorder %v3136, 0.0
        %vm3150 = vcmp.gt.f32.partialorder %v3137, 0.0
        %vm3151 = vcmp.gt.f32.partialorder %v3138, 0.0
        %vm3152 = vcmp.gt.f32.partialorder %v3139, 0.0
        %vm3153 = vcmp.gt.f32.partialorder %v3140, 0.0
        %vm3154 = vcmp.gt.f32.partialorder %v3141, 0.0
        %vm3155 = vcmp.gt.f32.partialorder %v3142, 0.0
        %vm3156 = vcmp.gt.f32.partialorder %v3143, 0.0
        %vm3157 = vcmp.gt.f32.partialorder %v3144, 0.0
        %v3158 = vmin.f32 %v3132, 0.0
        %v3159 = vmin.f32 %v3133, 0.0
        %v3160 = vmin.f32 %v3134, 0.0
        %v3161 = vmin.f32 %v3135, 0.0
        %v3162 = vmin.f32 %v3136, 0.0
        %v3163 = vmin.f32 %v3137, 0.0
        %v3164 = vmin.f32 %v3138, 0.0
        %v3165 = vmin.f32 %v3139, 0.0
        %v3166 = vmin.f32 %v3140, 0.0
        %v3167 = vmin.f32 %v3141, 0.0
        %v3168 = vmin.f32 %v3142, 0.0
        %v3169 = vmin.f32 %v3143, 0.0
        %v3170 = vmin.f32 %v3144, 0.0
        %v3171 = vmul.f32 %v3158, 1.442695
        %v3172 = vpow.pop %v3171
        %v3173 = vmul.f32 %v3159, 1.442695
        %v3174 = vpow.pop %v3173
        %v3175 = vmul.f32 %v3160, 1.442695
        %v3176 = vpow.pop %v3175
        %v3177 = vmul.f32 %v3161, 1.442695
        %v3178 = vpow.pop %v3177
        %v3179 = vmul.f32 %v3162, 1.442695
        %v3180 = vpow.pop %v3179
        %v3181 = vmul.f32 %v3163, 1.442695
        %v3182 = vpow.pop %v3181
        %v3183 = vmul.f32 %v3164, 1.442695
        %v3184 = vpow.pop %v3183
        %v3185 = vmul.f32 %v3165, 1.442695
        %v3186 = vpow.pop %v3185
        %v3187 = vmul.f32 %v3166, 1.442695
        %v3188 = vpow.pop %v3187
        %v3189 = vmul.f32 %v3167, 1.442695
        %v3190 = vpow.pop %v3189
        %v3191 = vmul.f32 %v3168, 1.442695
        %v3192 = vpow.pop %v3191
        %v3193 = vmul.f32 %v3169, 1.442695
        %v3194 = vpow.pop %v3193
        %v3195 = vmul.f32 %v3170, 1.442695
        %v3196 = vpow.pop %v3195
        %v3197 = vsub.f32 %v3172, 1.0
        %v3198 = vsub.f32 %v3174, 1.0
        %v3199 = vsub.f32 %v3176, 1.0
        %v3200 = vsub.f32 %v3178, 1.0
        %v3201 = vsub.f32 %v3180, 1.0
        %v3202 = vsub.f32 %v3182, 1.0
        %v3203 = vsub.f32 %v3184, 1.0
        %v3204 = vsub.f32 %v3186, 1.0
        %v3205 = vsub.f32 %v3188, 1.0
        %v3206 = vsub.f32 %v3190, 1.0
        %v3207 = vsub.f32 %v3192, 1.0
        %v3208 = vsub.f32 %v3194, 1.0
        %v3209 = vsub.f32 %v3196, 1.0
        %v3210 = vsel %vm3145, %v3132, %v3197
        %v3211 = vsel %vm3146, %v3133, %v3198
        %v3212 = vsel %vm3147, %v3134, %v3199
        %v3213 = vsel %vm3148, %v3135, %v3200
        %v3214 = vsel %vm3149, %v3136, %v3201
        %v3215 = vsel %vm3150, %v3137, %v3202
        %v3216 = vsel %vm3151, %v3138, %v3203
        %v3217 = vsel %vm3152, %v3139, %v3204
        %v3218 = vsel %vm3153, %v3140, %v3205
        %v3219 = vsel %vm3154, %v3141, %v3206
        %v3220 = vsel %vm3155, %v3142, %v3207
        %v3221 = vsel %vm3156, %v3143, %v3208
        %v3222 = vsel %vm3157, %v3144, %v3209
        %vm3223 = vcmask 850944
        %v3225 = vsel %vm3223, %v208, 0
        %v3228 = vsel %vm3223, %v209, 0
        %3230 = vmatprep.subr.mxu0 0.0
        %3231 = vmatpush1.msra.mxu0 0.0
        %3232 = vmatprep.subr.mxu0 0.0
        %3233 = vmatpush1.msra.mxu0 0.0
        %3234 = vmatprep.subr.mxu0 0.0
        %3235 = vmatpush1.msra.mxu0 0.0
        %3236 = vmatprep.subr.mxu0 0.0
        %3237 = vmatpush1.msra.mxu0 %v3222
        %3238 = vmatprep.subr.mxu0 0.0
        %3239 = vmatpush1.msra.mxu0 %v3221
        %3240 = vmatprep.subr.mxu0 0.0
        %3241 = vmatpush1.msra.mxu0 %v3220
        %3242 = vmatprep.subr.mxu0 0.0
        %3243 = vmatpush1.msra.mxu0 %v3219
        %3244 = vmatprep.subr.mxu0 0.0
        %3245 = vmatpush1.msra.mxu0 %v3218
        %3246 = vmatprep.subr.mxu0 0.0
        %3247 = vmatpush1.msra.mxu0 %v3217
        %3248 = vmatprep.subr.mxu0 0.0
        %3249 = vmatpush1.msra.mxu0 %v3216
        %3250 = vmatprep.subr.mxu0 0.0
        %3251 = vmatpush1.msra.mxu0 %v3215
        %3252 = vmatprep.subr.mxu0 0.0
        %3253 = vmatpush1.msra.mxu0 %v3214
        %3254 = vmatprep.subr.mxu0 0.0
        %3255 = vmatpush1.msra.mxu0 %v3213
        %3256 = vmatprep.subr.mxu0 0.0
        %3257 = vmatpush1.msra.mxu0 %v3212
        %3258 = vmatprep.subr.mxu0 0.0
        %3259 = vmatpush1.msra.mxu0 %v3211
        %3260 = vmatprep.subr.mxu0 0.0
        %3261 = vmatpush1.msra.mxu0 %v3210
        %3262 = vmatprep.subr.mxu0 0.0
        %3263 = vmatpush2.msra.mxu0 0.0
        %3264 = vmatprep.subr.mxu0 0.0
        %3265 = vmatpush2.msra.mxu0 0.0
        %3266 = vmatprep.subr.mxu0 0.0
        %3267 = vmatpush2.msra.mxu0 0.0
        %3268 = vmatprep.subr.mxu0 0.0
        %3269 = vmatpush2.msra.mxu0 0.0
        %3270 = vmatprep.subr.mxu0 0.0
        %3271 = vmatpush2.msra.mxu0 0.0
        %3272 = vmatprep.subr.mxu0 0.0
        %3273 = vmatpush2.msra.mxu0 0.0
        %3274 = vmatprep.subr.mxu0 0.0
        %3275 = vmatpush2.msra.mxu0 0.0
        %3276 = vmatprep.subr.mxu0 0.0
        %3277 = vmatpush2.msra.mxu0 0.0
        %3278 = vmatprep.subr.mxu0 0.0
        %3279 = vmatpush2.msra.mxu0 0.0
        %3280 = vmatprep.subr.mxu0 0.0
        %3281 = vmatpush2.msra.mxu0 0.0
        %3282 = vmatprep.subr.mxu0 0.0
        %3283 = vmatpush2.msra.mxu0 0.0
        %3284 = vmatprep.subr.mxu0 0.0
        %3285 = vmatpush2.msra.mxu0 0.0
        %3286 = vmatprep.subr.mxu0 0.0
        %3287 = vmatpush2.msra.mxu0 0.0
        %3288 = vmatprep.subr.mxu0 0.0
        %3289 = vmatpush2.msra.mxu0 0.0
        %3290 = vmatprep.subr.mxu0 0.0
        %3291 = vmatpush2.msra.mxu0 0.0
        %3292 = vmatprep.subr.mxu0 0.0
        %3293 = vmatpush2.msra.mxu0 0.0
        %3294 = vmatprep.mubr.f32.mxu0 0.0
        %3295 = vmatmul.mubr.f32.gmra.mxu0 %v3225
        %v3296 = vpop.f32.mrf.mxu0
        %v3297 = vadd.f32 0.0, %v3296
        %v3298 = vpop.f32.mrf.mxu0
        %3299 = vmatprep.mubr.f32.mxu0 0.0
        %3300 = vmatmul.mubr.f32.gmra.mxu0 %v3228
        %v3301 = vpop.f32.mrf.mxu0
        %v3302 = vadd.f32 0.0, %v3301
        %v3303 = vpop.f32.mrf.mxu0
        %3304 = vdwg.mxu0
        %s3305 = smul.u32 %s211, 16
        %s3306 = scalar_lea.vmem %s204, %s3305
        %3307 = vst [vmem:[%s3306] sm:$0xff] %v3297
        %3308 = vst [vmem:[%s3306 + $0x8] sm:$0x3] %v3302
      $region41: #{basenet_forward.1} parent=35 // loop_footer
        %s215 = sadd.s32 1, %s211
      $region42: #{basenet_forward.1} parent=35 // loop_footer_branch
        %210 = sbr.rel target = $region38
      $region43: #{basenet_forward.1} parent=35 // loop_exit
        _
      %s3309 = smul.u32 4, %s15
      %p3310 = scmp.lt.s32.totalorder %s3309, 7
      %s3311 = scalar_select %p3310, %s3309, 7
      %s3312 = smul.addr %s3311, 2
      %s3313 = smul.addr %s3312, 8
      %s3314 = scalar_lea.vmem %s4, %s3313
      // Predicated region
      $region44: #{basenet_forward.1} parent=35 // pred_check
        %p3315 = pneg %p122
      $region45: #{basenet_forward.1} parent=35 // pred_check_branch
        %3317 = sbr.rel (%p3315) target = $region47
      $region46: #{basenet_forward.1} parent=35 // pred_region
        %s3318 = smul.u32 4, %s15
      $region47: #{basenet_forward.1} parent=35 // pred_fallthru
        _
    $region36: #{basenet_forward.1} parent=5 // pred_fallthru
      _
    %p3319 = scmp.le.s32.totalorder 2, %s10
    // Predicated region
    $region48: #{basenet_forward.1} parent=5 // pred_check
      %p3320 = pneg %p3319
    $region49: #{basenet_forward.1} parent=5 // pred_check_branch
      %3322 = sbr.rel (%p3320) target = $region51
    $region50: #{basenet_forward.1} parent=5 // pred_region
      %s3323 = ssub.s32 %s10, 2
      // Predicated region
      $region52: #{basenet_forward.1} parent=50 // pred_check
        %p3324 = pneg %p128
      $region53: #{basenet_forward.1} parent=50 // pred_check_branch
        %3326 = sbr.rel (%p3324) target = $region55
      $region54: #{basenet_forward.1} parent=50 // pred_region
        %s3327 = smul.u32 4, %s16
        %p3328 = scmp.lt.s32.totalorder %s3327, 7
        %s3329 = scalar_select %p3328, %s3327, 7
        %s3330 = smul.addr %s3329, 2
        %s3331 = smul.addr %s3330, 8
        %s3332 = scalar_lea.vmem %s4, %s3331
      $region55: #{basenet_forward.1} parent=50 // pred_fallthru
        _
    $region51: #{basenet_forward.1} parent=5 // pred_fallthru
      _
  $region6: #{basenet_forward.1} parent=0 // loop_footer
    %s14 = sadd.s32 1, %s10
  $region7: #{basenet_forward.1} parent=0 // loop_footer_branch
    %9 = sbr.rel target = $region3
  $region8: #{basenet_forward.1} parent=0 // loop_exit
    _

</llo_original>
